<compile_context>
chip_gen: v6e
topology: v6e:2x2x1
jax: 0.10.0
libtpu: 0.0.40
codegen_flags: <defaults>
</compile_context>

<pallas_src>
import functools
import itertools

import numpy as np
import jax
import jax.numpy as jnp
from jax import lax
from jax.experimental import pallas as pl
from jax.experimental.pallas import tpu as pltpu

try:
    from scipy.optimize import linear_sum_assignment as _scipy_lsa
except Exception:  # pragma: no cover - scipy optional
    _scipy_lsa = None


# ----------------------------------------------------------------------------- #
# Pallas kernel: fused pairwise matching-cost tile
#   out[i, j] = w_bbox * L1(box_i, tbox_j)
#             + w_class * focal_cost(logits_i, class_j)
#             - w_iou * iou[i, j]
# ----------------------------------------------------------------------------- #
def _cost_kernel(logits_ref, boxes_ref, ids_ref, tbox_ref, iou_ref, out_ref, *,
                 alpha, gamma, w_class, w_bbox, w_iou, use_focal, gather_first):
    ids = ids_ref[...]                          # (1, Kt) i32 (padded cols = -1)
    kt = ids.shape[-1]
    x = logits_ref[...]                         # (T, C) f32
    c = x.shape[-1]

    # One-hot selector built on-VPU (never materialized in HBM); padded target
    # columns have id = -1 -> all-zero column (their output is sliced away).
    onehot = (lax.broadcasted_iota(jnp.int32, (c, kt), 0) == ids
              ).astype(jnp.float32)             # (C, Kt)

    def focal_score(z):
        # Stable focal matching cost, EUP-lean:
        #   p = sigmoid(z); -log p = softplus(-z); -log(1-p) = softplus(z)
        # -> 1x exp + 1x log + 1x approx reciprocal per element.
        az = jnp.abs(z)
        e = jnp.exp(-az)
        r = pl.reciprocal(1.0 + e, approx=True)     # sigmoid(|z|)  (EUP vrcp)
        p = jnp.where(z >= 0.0, r, e * r)           # sigmoid(z)
        q = 1.0 - p
        sp_neg = jnp.log(1.0 + e)                   # softplus(-|z|)
        neg_log_p = jnp.maximum(-z, 0.0) + sp_neg   # -log p
        neg_log_q = jnp.maximum(z, 0.0) + sp_neg    # -log (1-p)
        if gamma == 2.0:                            # specialize pow -> mul
            pg, qg = p * p, q * q
        else:
            pg, qg = p ** gamma, q ** gamma
        return alpha * qg * neg_log_p - (1.0 - alpha) * pg * neg_log_q

    if use_focal:
        if gather_first:
            # Focal cost is elementwise in the logit -> gather on the MXU first
            # when C >> Kt (cuts EUP/VPU work from O(T*C) to O(T*Kt)).
            g = jnp.dot(x, onehot, preferred_element_type=jnp.float32,
                        precision=lax.Precision.HIGHEST)          # (T, Kt)
            cost_class = focal_score(g)
        else:
            cost_class = jnp.dot(focal_score(x), onehot,
                                 preferred_element_type=jnp.float32,
                                 precision=lax.Precision.HIGHEST)  # (T, Kt)
    else:
        m = jnp.max(x, axis=-1, keepdims=True)
        e = jnp.exp(x - m)
        score = -(e / jnp.sum(e, axis=-1, keepdims=True))
        cost_class = jnp.dot(score, onehot, preferred_element_type=jnp.float32,
                             precision=lax.Precision.HIGHEST)

    # L1 bbox cost on normalized (cx, cy, w, h): 4 lane-dense VPU broadcasts.
    b = boxes_ref[...]                          # (T, 8) padded pred boxes
    t = tbox_ref[...]                           # (8, Kt) rows 0..3 = tgt coords
    cost_bbox = jnp.abs(b[:, 0:1] - t[0:1, :])
    for d in range(1, 4):
        cost_bbox = cost_bbox + jnp.abs(b[:, d:d + 1] - t[d:d + 1, :])

    out_ref[...] = (w_bbox * cost_bbox + w_class * cost_class
                    - w_iou * iou_ref[...])


# ----------------------------------------------------------------------------- #
# Tiling / builder
# ----------------------------------------------------------------------------- #
def _round_up(x, m):
    return ((x + m - 1) // m) * m


# Keep double-buffered tiles well under every generation's default scoped VMEM
# (v5e 16 MiB, v6e 32 MiB, v7x 32 MiB) — no vmem_limit_bytes over-request.
_VMEM_TILE_BUDGET = 12 * 1024 * 1024


def _choose_tiling(bn, c, k):
    """Pick (rt, bn_pad, kt, kp).

    - kt: lane-dense column block (multiple of 128, capped at 512 so large K
      doesn't blow VMEM); kp padded to a multiple of kt.
    - rt: large row tile (up to 2048) sized so double-buffered tiles fit the
      VMEM budget, with >= 2 row steps so v7x's two TensorCores both get work.
    """
    kp = _round_up(max(k, 1), 128)
    kt = min(kp, 512)
    kp = _round_up(kp, kt)                      # kp % kt == 0

    bn8 = _round_up(max(bn, 1), 8)
    bytes_per_row = 4 * (c + 8 + 2 * kt)        # logits + boxes + iou + out (f32)
    vmem_cap = max(8, (_VMEM_TILE_BUDGET // (2 * bytes_per_row)) // 8 * 8)
    max_rt = min(2048, vmem_cap)

    min_steps = 1 if bn8 <= 8 else 2            # >= 2 steps -> v7x megacore split
    steps = max(min_steps, -(-bn8 // max_rt))
    rt = _round_up(-(-bn8 // steps), 8)
    return rt, rt * steps, kt, kp


@functools.lru_cache(maxsize=None)
def _build_cost_fn(bn, c, k, alpha, gamma, w_class, w_bbox, w_iou, use_focal):
    """Returns a jitted fn computing the [bn, k] cost matrix (one pallas_call)."""
    rt, bn_pad, kt, kp = _choose_tiling(bn, c, k)
    gather_first = bool(use_focal) and c > kt

    kernel = functools.partial(
        _cost_kernel, alpha=float(alpha), gamma=float(gamma),
        w_class=float(w_class), w_bbox=float(w_bbox), w_iou=float(w_iou),
        use_focal=bool(use_focal), gather_first=gather_first)

    call = pl.pallas_call(
        kernel,
        out_shape=jax.ShapeDtypeStruct((bn_pad, kp), jnp.float32),
        grid_spec=pltpu.PrefetchScalarGridSpec(
            num_scalar_prefetch=0,
            grid=(bn_pad // rt, kp // kt),
            in_specs=[
                pl.BlockSpec((rt, c), lambda i, j: (i, 0)),
                pl.BlockSpec((rt, 8), lambda i, j: (i, 0)),
                pl.BlockSpec((1, kt), lambda i, j: (0, j)),
                pl.BlockSpec((8, kt), lambda i, j: (0, j)),
                pl.BlockSpec((rt, kt), lambda i, j: (i, j)),
            ],
            out_specs=pl.BlockSpec((rt, kt), lambda i, j: (i, j)),
        ),
        compiler_params=pltpu.CompilerParams(
            dimension_semantics=("parallel", "parallel")),
    )

    def cost_fn(logits2d, boxes2d, img_out, tgt_ids, tgt_bbox, img_tgt):
        logits2d = logits2d.astype(jnp.float32)
        boxes_n = boxes2d.astype(jnp.float32) / img_out.astype(jnp.float32)
        tbox_n = tgt_bbox.astype(jnp.float32) / img_tgt.astype(jnp.float32)

        # TODO(synk): rotated-polygon IoU (vertex clipping + angular sort) has
        # no clean Pallas/TPU equivalent, so it stays plain (jitted) JAX here.
        # (Reference also normalizes boxes before pairwise_iou_rotated.)
        iou = _rotated_iou_pairwise(boxes_n, tbox_n)            # (bn, k)

        # Padding is done inside jit so XLA fuses it with the producers
        # (no eager inflate of the iou stream in HBM on v5e).
        lg = jnp.pad(logits2d, ((0, bn_pad - bn), (0, 0)))
        bx = jnp.pad(boxes_n, ((0, bn_pad - bn), (0, 3)))       # 5 -> 8 cols (32B rows)
        iou_p = jnp.pad(iou, ((0, bn_pad - bn), (0, kp - k)))
        ids_p = jnp.full((1, kp), -1, jnp.int32).at[0, :k].set(
            tgt_ids.astype(jnp.int32))
        tb = jnp.zeros((8, kp), jnp.float32).at[:4, :k].set(tbox_n[:, :4].T)

        out = call(lg, bx, ids_p, tb, iou_p)
        return out[:bn, :k]

    return jax.jit(cost_fn)


# ----------------------------------------------------------------------------- #
# Rotated-box pairwise IoU (detectron2 pairwise_iou_rotated equivalent).
# ----------------------------------------------------------------------------- #
def _rbox_corners(boxes):
    cx, cy, w, h, a = (boxes[:, i] for i in range(5))
    th = a * (jnp.pi / 180.0)
    c, s = jnp.cos(th), jnp.sin(th)
    dx = jnp.stack([-w, w, w, -w], axis=1) * 0.5
    dy = jnp.stack([-h, -h, h, h], axis=1) * 0.5
    x = cx[:, None] + dx * c[:, None] - dy * s[:, None]
    y = cy[:, None] + dx * s[:, None] + dy * c[:, None]
    return jnp.stack([x, y], axis=-1)  # (K, 4, 2), CCW


def _cross2(a, b):
    return a[..., 0] * b[..., 1] - a[..., 1] * b[..., 0]


def _points_inside(pts, poly):
    ps = poly[:, None, :, :]
    pe = jnp.roll(poly, -1, axis=1)[:, None, :, :]
    d = pe - ps
    rel = pts[:, :, None, :] - ps
    return jnp.all(_cross2(d, rel) >= -1e-6, axis=-1)  # (K, 4)


def _rotated_iou_diag(b1, b2):
    k = b1.shape[0]
    c1, c2 = _rbox_corners(b1), _rbox_corners(b2)
    area1 = b1[:, 2] * b1[:, 3]
    area2 = b2[:, 2] * b2[:, 3]

    d1 = jnp.roll(c1, -1, axis=1) - c1
    d2 = jnp.roll(c2, -1, axis=1) - c2
    s1, dd1 = c1[:, :, None, :], d1[:, :, None, :]
    s2, dd2 = c2[:, None, :, :], d2[:, None, :, :]
    denom = _cross2(dd1, dd2)
    safe = jnp.where(jnp.abs(denom) < 1e-9, 1.0, denom)
    diff = s2 - s1
    t = _cross2(diff, dd2) / safe
    u = _cross2(diff, dd1) / safe
    inter_valid = ((jnp.abs(denom) > 1e-9) & (t >= 0.0) & (t <= 1.0)
                   & (u >= 0.0) & (u <= 1.0))
    inter_pts = s1 + t[..., None] * dd1  # (K,4,4,2)

    pts = jnp.concatenate([inter_pts.reshape(k, 16, 2), c1, c2], axis=1)  # (K,24,2)
    valid = jnp.concatenate(
        [inter_valid.reshape(k, 16), _points_inside(c1, c2), _points_inside(c2, c1)],
        axis=1)

    nv = jnp.sum(valid.astype(jnp.int32), axis=1)
    vmask = valid.astype(jnp.float32)[..., None]
    center = jnp.sum(pts * vmask, axis=1) / jnp.maximum(nv, 1)[:, None].astype(jnp.float32)
    ang = jnp.arctan2(pts[..., 1] - center[:, None, 1], pts[..., 0] - center[:, None, 0])
    ang = jnp.where(valid, ang, 1e9)
    order = jnp.argsort(ang, axis=1)
    sp = jnp.take_along_axis(pts, order[..., None], axis=1)

    idx = jnp.arange(24)[None, :]
    nxt = jnp.where(idx + 1 < nv[:, None], idx + 1, 0)
    spn = jnp.take_along_axis(sp, nxt[..., None], axis=1)
    cr = sp[..., 0] * spn[..., 1] - sp[..., 1] * spn[..., 0]
    cr = jnp.where(idx < nv[:, None], cr, 0.0)
    inter_area = 0.5 * jnp.abs(jnp.sum(cr, axis=1))
    inter_area = jnp.where(nv >= 3, inter_area, 0.0)
    union = area1 + area2 - inter_area
    return inter_area / jnp.maximum(union, 1e-9)


def _rotated_iou_pairwise(b1, b2):
    """b1: (P,5), b2: (K,5) -> (P,K) pairwise rotated IoU."""
    p, k = b1.shape[0], b2.shape[0]
    b1r = jnp.repeat(b1, k, axis=0)
    b2r = jnp.tile(b2, (p, 1))
    return _rotated_iou_diag(b1r, b2r).reshape(p, k)


# ----------------------------------------------------------------------------- #
# Hungarian assignment (scipy if available; numpy fallback).
# Host-side, same as the reference (which moves C to .cpu()).
# ----------------------------------------------------------------------------- #
def _hungarian_min(cost):
    """cost: (n, m) with n <= m; returns col index assigned to each row."""
    n, m = cost.shape
    INF = float("inf")
    u = np.zeros(n + 1, dtype=np.float64)
    v = np.zeros(m + 1, dtype=np.float64)
    p = np.zeros(m + 1, dtype=np.int64)
    way = np.zeros(m + 1, dtype=np.int64)
    for i in range(1, n + 1):
        p[0] = i
        j0 = 0
        minv = np.full(m + 1, INF, dtype=np.float64)
        used = np.zeros(m + 1, dtype=bool)
        while True:
            used[j0] = True
            i0 = p[j0]
            delta = INF
            j1 = 0
            for j in range(1, m + 1):
                if not used[j]:
                    cur = cost[i0 - 1, j - 1] - u[i0] - v[j]
                    if cur < minv[j]:
                        minv[j] = cur
                        way[j] = j0
                    if minv[j] < delta:
                        delta = minv[j]
                        j1 = j
            for j in range(m + 1):
                if used[j]:
                    u[p[j]] += delta
                    v[j] -= delta
                else:
                    minv[j] -= delta
            j0 = j1
            if p[j0] == 0:
                break
        while True:
            j1 = way[j0]
            p[j0] = p[j1]
            j0 = j1
            if j0 == 0:
                break
    row_to_col = np.full(n, -1, dtype=np.int64)
    for j in range(1, m + 1):
        if p[j] != 0:
            row_to_col[p[j] - 1] = j - 1
    return row_to_col


def _linear_sum_assignment(cost):
    cost = np.asarray(cost, dtype=np.float64)
    nr, nc = cost.shape
    if nr == 0 or nc == 0:
        return np.zeros(0, np.int64), np.zeros(0, np.int64)
    if _scipy_lsa is not None:
        rows, cols = _scipy_lsa(cost)
        return np.asarray(rows, np.int64), np.asarray(cols, np.int64)
    if nr <= nc:
        cols = _hungarian_min(cost)
        rows = np.arange(nr, dtype=np.int64)
    else:
        rows = _hungarian_min(cost.T)           # for each col: assigned row
        cols = np.arange(nc, dtype=np.int64)
        order = np.argsort(rows, kind="stable")
        rows, cols = rows[order], cols[order]
    return rows.astype(np.int64), cols.astype(np.int64)


# ----------------------------------------------------------------------------- #
# HungarianMatcher port
# ----------------------------------------------------------------------------- #
class HungarianMatcherPallas:
    def __init__(self, cost_class=1.0, cost_bbox=1.0, cost_iou=1.0,
                 use_focal=True, focal_alpha=0.25, focal_gamma=2.0):
        assert cost_class != 0 or cost_bbox != 0 or cost_iou != 0, "all costs cant be 0"
        self.cost_class = float(cost_class)
        self.cost_bbox = float(cost_bbox)
        self.cost_iou = float(cost_iou)
        self.use_focal = bool(use_focal)
        self.focal_loss_alpha = float(focal_alpha)
        self.focal_loss_gamma = float(focal_gamma)
        self._last_cost = None   # device cost matrix from the most recent forward()

    def cost_matrix(self, outputs, targets):
        """Returns the device [B*N, K] cost matrix (single fused Pallas call)."""
        pred_logits = jnp.asarray(outputs["pred_logits"], jnp.float32)   # [B,N,C]
        pred_boxes = jnp.asarray(outputs["pred_boxes"], jnp.float32)     # [B,N,5]
        b, n, c = pred_logits.shape
        bn = b * n

        logits2d = pred_logits.reshape(bn, c)
        boxes2d = pred_boxes.reshape(bn, 5)

        tgt_ids = jnp.concatenate(
            [jnp.asarray(t["labels"], jnp.int32) for t in targets])
        tgt_bbox = jnp.concatenate(
            [jnp.asarray(t["boxes_xyxy"], jnp.float32) for t in targets], axis=0)
        img_out = jnp.broadcast_to(
            jnp.stack([jnp.asarray(t["image_size_xyxy"], jnp.float32)
                       for t in targets])[:, None, :],
            (b, n, 5)).reshape(bn, 5)
        img_tgt = jnp.concatenate(
            [jnp.asarray(t["image_size_xyxy_tgt"], jnp.float32) for t in targets], axis=0)

        k = int(tgt_ids.shape[0])
        fn = _build_cost_fn(bn, c, k, self.focal_loss_alpha, self.focal_loss_gamma,
                            self.cost_class, self.cost_bbox, self.cost_iou,
                            self.use_focal)
        return fn(logits2d, boxes2d, img_out, tgt_ids, tgt_bbox, img_tgt)

    def forward(self, outputs, targets):
        b, n = outputs["pred_logits"].shape[:2]
        sizes = [int(np.asarray(jax.device_get(t["boxes"])).shape[0]) for t in targets]
        k = int(sum(sizes))
        if k == 0:
            return [(np.zeros(0, np.int64), np.zeros(0, np.int64)) for _ in targets]

        cmat = self.cost_matrix(outputs, targets)          # [B*N, K] on device
        self._last_cost = cmat
        cnp = np.asarray(jax.device_get(cmat)).reshape(b, n, k)

        indices, off = [], 0
        for bi, sz in enumerate(sizes):
            sub = cnp[bi, :, off:off + sz]
            off += sz
            indices.append(_linear_sum_assignment(sub))
        return indices

    __call__ = forward


# ----------------------------------------------------------------------------- #
# Demo
# ----------------------------------------------------------------------------- #
def _rand_boxes(key, n, w_img, h_img):
    kx, ky, kw, kh, ka = jax.random.split(key, 5)
    cx = jax.random.uniform(kx, (n,), minval=8.0, maxval=w_img - 8.0)
    cy = jax.random.uniform(ky, (n,), minval=8.0, maxval=h_img - 8.0)
    w = jax.random.uniform(kw, (n,), minval=4.0, maxval=16.0)
    h = jax.random.uniform(kh, (n,), minval=4.0, maxval=16.0)
    a = jax.random.uniform(ka, (n,), minval=-90.0, maxval=90.0)
    return jnp.stack([cx, cy, w, h, a], axis=1).astype(jnp.float32)


def _brute_force_min_cost(cost):
    """Optimal assignment cost for a small [nr, nc] matrix (nc <= nr)."""
    nr, nc = cost.shape
    best = None
    for perm in itertools.permutations(range(nr), nc):
        s = sum(cost[perm[j], j] for j in range(nc))
        best = s if best is None else min(best, s)
    return best


if __name__ == "__main__":
    key = jax.random.PRNGKey(0)
    B, N, C = 2, 8, 16
    W_IMG, H_IMG = 64.0, 48.0

    k1, k2, k5 = jax.random.split(key, 3)
    pred_logits = jax.random.normal(k1, (B, N, C), jnp.float32)
    pred_boxes = _rand_boxes(k2, B * N, W_IMG, H_IMG).reshape(B, N, 5)

    n_targets = [3, 2]
    tgt_keys = jax.random.split(k5, len(n_targets) * 2)
    targets = []
    img_sz_vec = jnp.array([W_IMG, H_IMG, W_IMG, H_IMG, 1.0], jnp.float32)
    for bi, nt in enumerate(n_targets):
        labels = jax.random.randint(tgt_keys[2 * bi], (nt,), 0, C).astype(jnp.int32)
        boxes = _rand_boxes(tgt_keys[2 * bi + 1], nt, W_IMG, H_IMG)
        targets.append({
            "labels": labels,
            "boxes": boxes,
            "boxes_xyxy": boxes,
            "image_size_xyxy": img_sz_vec,
            "image_size_xyxy_tgt": jnp.tile(img_sz_vec[None, :], (nt, 1)),
        })

    outputs = {"pred_logits": pred_logits, "pred_boxes": pred_boxes}

    matcher = HungarianMatcherPallas(
        cost_class=2.0, cost_bbox=5.0, cost_iou=2.0,
        use_focal=True, focal_alpha=0.25, focal_gamma=2.0)

    indices = matcher.forward(outputs, targets)
    jax.block_until_ready(matcher._last_cost)

    # --- sanity checks -------------------------------------------------------
    # 1) kernel cost matrix vs pure-JAX reference (PyTorch formula).
    #    Tolerance accounts for the EUP approximate reciprocal in the stable
    #    in-kernel focal rewrite.
    bn = B * N
    logits2d = pred_logits.reshape(bn, C)
    img_out = jnp.broadcast_to(img_sz_vec[None, None, :], (B, N, 5)).reshape(bn, 5)
    boxes_n = pred_boxes.reshape(bn, 5) / img_out
    tgt_ids_np = np.concatenate([np.asarray(jax.device_get(t["labels"])) for t in targets])
    tgt_bbox = jnp.concatenate([t["boxes_xyxy"] for t in targets], axis=0)
    img_tgt = jnp.concatenate([t["image_size_xyxy_tgt"] for t in targets], axis=0)
    tgt_bbox_n = tgt_bbox / img_tgt
    iou = _rotated_iou_pairwise(boxes_n, tgt_bbox_n)
    p = jax.nn.sigmoid(logits2d)
    a_, g_ = matcher.focal_loss_alpha, matcher.focal_loss_gamma
    neg = (1 - a_) * (p ** g_) * (-jnp.log(1 - p + 1e-8))
    pos = a_ * ((1 - p) ** g_) * (-jnp.log(p + 1e-8))
    cc = (pos - neg)[:, tgt_ids_np]
    cb = jnp.sum(jnp.abs(boxes_n[:, None, :4] - tgt_bbox_n[None, :, :4]), axis=-1)
    c_ref = matcher.cost_bbox * cb + matcher.cost_class * cc - matcher.cost_iou * iou
    c_ker = np.asarray(jax.device_get(matcher._last_cost))
    c_ref_np = np.asarray(jax.device_get(c_ref))
    assert c_ker.shape == (bn, sum(n_targets)), f"bad shape {c_ker.shape}"
    assert np.all(np.isfinite(c_ker)), "non-finite cost matrix"
    assert np.allclose(c_ker, c_ref_np, atol=1e-2, rtol=1e-2), (
        "Pallas cost mismatch: max abs diff "
        f"{np.max(np.abs(c_ker - c_ref_np))}")

    # 2) Hungarian assignment is optimal (brute force for these tiny chunks)
    kk = sum(n_targets)
    c_full = c_ker.reshape(B, N, kk)
    off = 0
    for bi, sz in enumerate(n_targets):
        chunk = c_full[bi, :, off:off + sz]
        off += sz
        rows, cols = indices[bi]
        assert len(rows) == sz and len(cols) == sz
        got = float(np.sum(chunk[rows, cols]))
        best = float(_brute_force_min_cost(chunk))
        assert abs(got - best) < 1e-5, f"suboptimal assignment: {got} vs {best}"

    print("KERNEL_OK")
</pallas_src>

<mosaic_0001>
module attributes {stable_mosaic.version = 11 : i64} {
  func.func @_cost_kernel(%arg0: i32, %arg1: i32, %arg2: memref<8x16xf32, #tpu.memory_space<vmem>>, %arg3: memref<8x8xf32, #tpu.memory_space<vmem>>, %arg4: memref<1x128xi32, #tpu.memory_space<vmem>>, %arg5: memref<8x128xf32, #tpu.memory_space<vmem>>, %arg6: memref<8x128xf32, #tpu.memory_space<vmem>>, %arg7: memref<8x128xf32, #tpu.memory_space<vmem>>) attributes {dimension_semantics = [#tpu.dimension_semantics<parallel>, #tpu.dimension_semantics<parallel>], iteration_bounds = array<i64: 2, 1>, scalar_prefetch = 0 : i64, scratch_operands = 0 : i64, tpu.core_type = #tpu.core_type<tc>, window_params = [{transform_indices = @transform_0, window_bounds = array<i64: 8, 16>}, {transform_indices = @transform_1, window_bounds = array<i64: 8, 8>}, {transform_indices = @transform_2, window_bounds = array<i64: 1, 128>}, {transform_indices = @transform_3, window_bounds = array<i64: 8, 128>}, {transform_indices = @transform_4, window_bounds = array<i64: 8, 128>}, {transform_indices = @transform_5, window_bounds = array<i64: 8, 128>}]} {
    %c0 = arith.constant 0 : index
    %c0_0 = arith.constant 0 : index
    %0 = vector.load %arg4[%c0, %c0_0] : memref<1x128xi32, #tpu.memory_space<vmem>>, vector<1x128xi32>
    %c0_1 = arith.constant 0 : index
    %c0_2 = arith.constant 0 : index
    %1 = vector.load %arg2[%c0_1, %c0_2] : memref<8x16xf32, #tpu.memory_space<vmem>>, vector<8x16xf32>
    %2 = tpu.iota {dimensions = array<i32: 0>} : vector<16x128xi32>
    %3 = vector.broadcast %0 : vector<1x128xi32> to vector<16x128xi32>
    %4 = arith.cmpi eq, %2, %3 : vector<16x128xi32>
    %5 = arith.extui %4 : vector<16x128xi1> to vector<16x128xi32>
    %6 = arith.sitofp %5 : vector<16x128xi32> to vector<16x128xf32>
    %7 = math.absf %1 : vector<8x16xf32>
    %cst = arith.constant 0.000000e+00 : f32
    %8 = vector.broadcast %cst : f32 to vector<8x16xf32>
    %9 = arith.subf %8, %7 : vector<8x16xf32>
    %10 = math.exp %9 : vector<8x16xf32>
    %cst_3 = arith.constant 1.000000e+00 : f32
    %11 = vector.broadcast %cst_3 : f32 to vector<8x16xf32>
    %12 = arith.addf %11, %10 : vector<8x16xf32>
    %13 = tpu.reciprocal %12 {approx = true} : vector<8x16xf32> -> vector<8x16xf32>
    %cst_4 = arith.constant 0.000000e+00 : f32
    %14 = vector.broadcast %cst_4 : f32 to vector<8x16xf32>
    %15 = arith.cmpf oge, %1, %14 : vector<8x16xf32>
    %16 = arith.mulf %10, %13 : vector<8x16xf32>
    %17 = arith.select %15, %13, %16 : vector<8x16xi1>, vector<8x16xf32>
    %cst_5 = arith.constant 1.000000e+00 : f32
    %18 = vector.broadcast %cst_5 : f32 to vector<8x16xf32>
    %19 = arith.subf %18, %17 : vector<8x16xf32>
    %cst_6 = arith.constant 1.000000e+00 : f32
    %20 = vector.broadcast %cst_6 : f32 to vector<8x16xf32>
    %21 = arith.addf %20, %10 : vector<8x16xf32>
    %22 = math.log %21 : vector<8x16xf32>
    %cst_7 = arith.constant 0.000000e+00 : f32
    %23 = vector.broadcast %cst_7 : f32 to vector<8x16xf32>
    %24 = arith.subf %23, %1 : vector<8x16xf32>
    %cst_8 = arith.constant 0.000000e+00 : f32
    %25 = vector.broadcast %cst_8 : f32 to vector<8x16xf32>
    %26 = arith.maximumf %24, %25 : vector<8x16xf32>
    %27 = arith.addf %26, %22 : vector<8x16xf32>
    %cst_9 = arith.constant 0.000000e+00 : f32
    %28 = vector.broadcast %cst_9 : f32 to vector<8x16xf32>
    %29 = arith.maximumf %1, %28 : vector<8x16xf32>
    %30 = arith.addf %29, %22 : vector<8x16xf32>
    %31 = arith.mulf %17, %17 : vector<8x16xf32>
    %32 = arith.mulf %19, %19 : vector<8x16xf32>
    %cst_10 = arith.constant 2.500000e-01 : f32
    %33 = vector.broadcast %cst_10 : f32 to vector<8x16xf32>
    %34 = arith.mulf %33, %32 : vector<8x16xf32>
    %35 = arith.mulf %34, %27 : vector<8x16xf32>
    %cst_11 = arith.constant 7.500000e-01 : f32
    %36 = vector.broadcast %cst_11 : f32 to vector<8x16xf32>
    %37 = arith.mulf %36, %31 : vector<8x16xf32>
    %38 = arith.mulf %37, %30 : vector<8x16xf32>
    %39 = arith.subf %35, %38 : vector<8x16xf32>
    %cst_12 = arith.constant dense<0.000000e+00> : vector<8x128xf32>
    %40 = tpu.matmul %39, %6, %cst_12 {dimension_numbers = #tpu.dot_dimension_numbers<[1], [0], [0], [1], [0, 0, 1, 1], [], []>, precision = #tpu.contract_precision<fp32>} : vector<8x16xf32>, vector<16x128xf32>, vector<8x128xf32> -> vector<8x128xf32>
    %c0_13 = arith.constant 0 : index
    %c0_14 = arith.constant 0 : index
    %41 = vector.load %arg3[%c0_13, %c0_14] : memref<8x8xf32, #tpu.memory_space<vmem>>, vector<8x8xf32>
    %c0_15 = arith.constant 0 : index
    %c0_16 = arith.constant 0 : index
    %42 = vector.load %arg5[%c0_15, %c0_16] : memref<8x128xf32, #tpu.memory_space<vmem>>, vector<8x128xf32>
    %43 = vector.extract_strided_slice %41 {offsets = [0, 0], sizes = [8, 1], strides = [1, 1]} : vector<8x8xf32> to vector<8x1xf32>
    %44 = vector.extract_strided_slice %42 {offsets = [0, 0], sizes = [1, 128], strides = [1, 1]} : vector<8x128xf32> to vector<1x128xf32>
    %45 = vector.broadcast %43 : vector<8x1xf32> to vector<8x128xf32>
    %46 = vector.broadcast %44 : vector<1x128xf32> to vector<8x128xf32>
    %47 = arith.subf %45, %46 : vector<8x128xf32>
    %48 = math.absf %47 : vector<8x128xf32>
    %49 = vector.extract_strided_slice %41 {offsets = [0, 1], sizes = [8, 1], strides = [1, 1]} : vector<8x8xf32> to vector<8x1xf32>
    %50 = vector.extract_strided_slice %42 {offsets = [1, 0], sizes = [1, 128], strides = [1, 1]} : vector<8x128xf32> to vector<1x128xf32>
    %51 = vector.broadcast %49 : vector<8x1xf32> to vector<8x128xf32>
    %52 = vector.broadcast %50 : vector<1x128xf32> to vector<8x128xf32>
    %53 = arith.subf %51, %52 : vector<8x128xf32>
    %54 = math.absf %53 : vector<8x128xf32>
    %55 = arith.addf %48, %54 : vector<8x128xf32>
    %56 = vector.extract_strided_slice %41 {offsets = [0, 2], sizes = [8, 1], strides = [1, 1]} : vector<8x8xf32> to vector<8x1xf32>
    %57 = vector.extract_strided_slice %42 {offsets = [2, 0], sizes = [1, 128], strides = [1, 1]} : vector<8x128xf32> to vector<1x128xf32>
    %58 = vector.broadcast %56 : vector<8x1xf32> to vector<8x128xf32>
    %59 = vector.broadcast %57 : vector<1x128xf32> to vector<8x128xf32>
    %60 = arith.subf %58, %59 : vector<8x128xf32>
    %61 = math.absf %60 : vector<8x128xf32>
    %62 = arith.addf %55, %61 : vector<8x128xf32>
    %63 = vector.extract_strided_slice %41 {offsets = [0, 3], sizes = [8, 1], strides = [1, 1]} : vector<8x8xf32> to vector<8x1xf32>
    %64 = vector.extract_strided_slice %42 {offsets = [3, 0], sizes = [1, 128], strides = [1, 1]} : vector<8x128xf32> to vector<1x128xf32>
    %65 = vector.broadcast %63 : vector<8x1xf32> to vector<8x128xf32>
    %66 = vector.broadcast %64 : vector<1x128xf32> to vector<8x128xf32>
    %67 = arith.subf %65, %66 : vector<8x128xf32>
    %68 = math.absf %67 : vector<8x128xf32>
    %69 = arith.addf %62, %68 : vector<8x128xf32>
    %cst_17 = arith.constant 5.000000e+00 : f32
    %70 = vector.broadcast %cst_17 : f32 to vector<8x128xf32>
    %71 = arith.mulf %70, %69 : vector<8x128xf32>
    %cst_18 = arith.constant 2.000000e+00 : f32
    %72 = vector.broadcast %cst_18 : f32 to vector<8x128xf32>
    %73 = arith.mulf %72, %40 : vector<8x128xf32>
    %74 = arith.addf %71, %73 : vector<8x128xf32>
    %c0_19 = arith.constant 0 : index
    %c0_20 = arith.constant 0 : index
    %75 = vector.load %arg6[%c0_19, %c0_20] : memref<8x128xf32, #tpu.memory_space<vmem>>, vector<8x128xf32>
    %cst_21 = arith.constant 2.000000e+00 : f32
    %76 = vector.broadcast %cst_21 : f32 to vector<8x128xf32>
    %77 = arith.mulf %76, %75 : vector<8x128xf32>
    %78 = arith.subf %74, %77 : vector<8x128xf32>
    %c0_22 = arith.constant 0 : index
    %c0_23 = arith.constant 0 : index
    %79 = vector.load %arg7[%c0_22, %c0_23] : memref<8x128xf32, #tpu.memory_space<vmem>>, vector<8x128xf32>
    tpu.vector_store %arg7[%c0_22, %c0_23], %78 {strides = array<i32>} : memref<8x128xf32, #tpu.memory_space<vmem>>, vector<8x128xf32>,
    return
  }
  func.func @transform_0(%arg0: i32, %arg1: i32) -> (i32, i32) {
    %c0_i32 = arith.constant 0 : i32
    %c0_i32_0 = arith.constant 0 : i32
    return %arg0, %c0_i32 : i32, i32
  }
  func.func @transform_1(%arg0: i32, %arg1: i32) -> (i32, i32) {
    %c0_i32 = arith.constant 0 : i32
    %c0_i32_0 = arith.constant 0 : i32
    return %arg0, %c0_i32 : i32, i32
  }
  func.func @transform_2(%arg0: i32, %arg1: i32) -> (i32, i32) {
    %c0_i32 = arith.constant 0 : i32
    %c0_i32_0 = arith.constant 0 : i32
    return %c0_i32, %arg1 : i32, i32
  }
  func.func @transform_3(%arg0: i32, %arg1: i32) -> (i32, i32) {
    %c0_i32 = arith.constant 0 : i32
    %c0_i32_0 = arith.constant 0 : i32
    return %c0_i32, %arg1 : i32, i32
  }
  func.func @transform_4(%arg0: i32, %arg1: i32) -> (i32, i32) {
    %c0_i32 = arith.constant 0 : i32
    return %arg0, %arg1 : i32, i32
  }
  func.func @transform_5(%arg0: i32, %arg1: i32) -> (i32, i32) {
    %c0_i32 = arith.constant 0 : i32
    return %arg0, %arg1 : i32, i32
  }
}

</mosaic_0001>

<llo_original>
// kernel: div.10
$region0: #{div.10}
  #allocation0 [shape = 's32[1]{0}', space=sflag, size = 0x4, scoped, tag = 'scoped memory for div.10']
  %s0 = inlined_call_operand.vmem [shape: f32[5,5], index: 0, kind: input, shape index: {}]
  %s1 = inlined_call_operand.vmem [shape: f32[5,5], index: 1, kind: input, shape index: {}]
  %s2 = inlined_call_operand.vmem [shape: f32[5,5], index: 2, kind: output, shape index: {}]
  %v3 = vld [vmem:[%s0] sm:$0x1f]
  %v4 = vld [vmem:[%s1] sm:$0x1f]
  %5 = xla_tuple %v3, %v4
  %6 = xla_tuple %5
  %v7 = vrcp.pop %v4
  %v8 = vmul.f32 %v3, %v7
  %9 = xla_tuple %v8
  %10 = vst [vmem:[%s2] sm:$0xff] %v8

// kernel: tile.9
$region0: #{tile.9}
  %s0 = inlined_call_operand.vmem [shape: f32[16,5,5], index: 0, kind: input, shape index: {}]
  %s1 = inlined_call_operand.vmem [shape: f32[80,5], index: 1, kind: output, shape index: {}]
  %s2 = smov 3
  %v3 = vld [vmem:[%s0] ss:$16 sm:%s2]
  %s4 = smov 12
  %v5 = vld [vmem:[%s0] ss:$16 sm:%s4]
  %vm6 = vcmask 1043458
  %v7 = vsel %vm6, %v5, %v3
  %s8 = scalar_lea.vmem %s0, 60
  %v9 = vld [vmem:[%s8] sm:$0x10]
  %vm10 = vcmask 1044484
  %v11 = vsel %vm10, %v9, %v7
  %vm12 = vcmask 39936
  %13 = vst.msk [vmem:[%s1] sm:$0x1f] %vm12, %v11
  %s14 = scalar_lea.vmem %s0, 15
  %s15 = smov 3
  %v16 = vld [vmem:[%s14] ss:$16 sm:%s15]
  %s17 = scalar_lea.vmem %s0, 15
  %s18 = smov 12
  %v19 = vld [vmem:[%s17] ss:$16 sm:%s18]
  %vm20 = vcmask 1043458
  %v21 = vsel %vm20, %v19, %v16
  %s22 = scalar_lea.vmem %s0, 75
  %v23 = vld [vmem:[%s22] sm:$0x10]
  %vm24 = vcmask 1044484
  %v25 = vsel %vm24, %v23, %v21
  %26 = vrot.lane.b32.xlu0 %v25, 75
  %v27 = vpop.permute.xlu0 %26
  %vm28 = vcmask 654936
  %29 = vst.msk [vmem:[%s1] sm:$0x1f] %vm28, %v27
  %s30 = scalar_lea.vmem %s0, 14
  %s31 = smov 3
  %v32 = vld [vmem:[%s30] ss:$16 sm:%s31]
  %s33 = scalar_lea.vmem %s0, 14
  %s34 = smov 12
  %v35 = vld [vmem:[%s33] ss:$16 sm:%s34]
  %vm36 = vcmask 1043458
  %v37 = vsel %vm36, %v35, %v32
  %s38 = scalar_lea.vmem %s0, 74
  %v39 = vld [vmem:[%s38] sm:$0x10]
  %vm40 = vcmask 1044484
  %v41 = vsel %vm40, %v39, %v37
  %42 = vrot.lane.b32.xlu0 %v41, 70
  %v43 = vpop.permute.xlu0 %42
  %vm44 = vcmask 613936
  %45 = vst.msk [vmem:[%s1] sm:$0x1f] %vm44, %v43
  %s46 = scalar_lea.vmem %s0, 13
  %s47 = smov 3
  %v48 = vld [vmem:[%s46] ss:$16 sm:%s47]
  %s49 = scalar_lea.vmem %s0, 13
  %s50 = smov 12
  %v51 = vld [vmem:[%s49] ss:$16 sm:%s50]
  %vm52 = vcmask 1043458
  %v53 = vsel %vm52, %v51, %v48
  %s54 = scalar_lea.vmem %s0, 73
  %v55 = vld [vmem:[%s54] sm:$0x10]
  %vm56 = vcmask 1044484
  %v57 = vsel %vm56, %v55, %v53
  %58 = vrot.lane.b32.xlu0 %v57, 65
  %v59 = vpop.permute.xlu0 %58
  %vm60 = vcmask 572936
  %61 = vst.msk [vmem:[%s1] sm:$0x1f] %vm60, %v59
  %s62 = scalar_lea.vmem %s0, 12
  %s63 = smov 3
  %v64 = vld [vmem:[%s62] ss:$16 sm:%s63]
  %s65 = scalar_lea.vmem %s0, 12
  %s66 = smov 12
  %v67 = vld [vmem:[%s65] ss:$16 sm:%s66]
  %vm68 = vcmask 1043458
  %v69 = vsel %vm68, %v67, %v64
  %s70 = scalar_lea.vmem %s0, 72
  %v71 = vld [vmem:[%s70] sm:$0x10]
  %vm72 = vcmask 1044484
  %v73 = vsel %vm72, %v71, %v69
  %74 = vrot.lane.b32.xlu0 %v73, 60
  %v75 = vpop.permute.xlu0 %74
  %vm76 = vcmask 531936
  %77 = vst.msk [vmem:[%s1] sm:$0x1f] %vm76, %v75
  %s78 = scalar_lea.vmem %s0, 11
  %s79 = smov 3
  %v80 = vld [vmem:[%s78] ss:$16 sm:%s79]
  %s81 = scalar_lea.vmem %s0, 11
  %s82 = smov 12
  %v83 = vld [vmem:[%s81] ss:$16 sm:%s82]
  %vm84 = vcmask 1043458
  %v85 = vsel %vm84, %v83, %v80
  %s86 = scalar_lea.vmem %s0, 71
  %v87 = vld [vmem:[%s86] sm:$0x10]
  %vm88 = vcmask 1044484
  %v89 = vsel %vm88, %v87, %v85
  %90 = vrot.lane.b32.xlu0 %v89, 55
  %v91 = vpop.permute.xlu0 %90
  %vm92 = vcmask 490936
  %93 = vst.msk [vmem:[%s1] sm:$0x1f] %vm92, %v91
  %s94 = scalar_lea.vmem %s0, 10
  %s95 = smov 3
  %v96 = vld [vmem:[%s94] ss:$16 sm:%s95]
  %s97 = scalar_lea.vmem %s0, 10
  %s98 = smov 12
  %v99 = vld [vmem:[%s97] ss:$16 sm:%s98]
  %vm100 = vcmask 1043458
  %v101 = vsel %vm100, %v99, %v96
  %s102 = scalar_lea.vmem %s0, 70
  %v103 = vld [vmem:[%s102] sm:$0x10]
  %vm104 = vcmask 1044484
  %v105 = vsel %vm104, %v103, %v101
  %106 = vrot.lane.b32.xlu0 %v105, 50
  %v107 = vpop.permute.xlu0 %106
  %vm108 = vcmask 449936
  %109 = vst.msk [vmem:[%s1] sm:$0x1f] %vm108, %v107
  %s110 = scalar_lea.vmem %s0, 9
  %s111 = smov 3
  %v112 = vld [vmem:[%s110] ss:$16 sm:%s111]
  %s113 = scalar_lea.vmem %s0, 9
  %s114 = smov 12
  %v115 = vld [vmem:[%s113] ss:$16 sm:%s114]
  %vm116 = vcmask 1043458
  %v117 = vsel %vm116, %v115, %v112
  %s118 = scalar_lea.vmem %s0, 69
  %v119 = vld [vmem:[%s118] sm:$0x10]
  %vm120 = vcmask 1044484
  %v121 = vsel %vm120, %v119, %v117
  %122 = vrot.lane.b32.xlu0 %v121, 45
  %v123 = vpop.permute.xlu0 %122
  %vm124 = vcmask 408936
  %125 = vst.msk [vmem:[%s1] sm:$0x1f] %vm124, %v123
  %s126 = scalar_lea.vmem %s0, 8
  %s127 = smov 3
  %v128 = vld [vmem:[%s126] ss:$16 sm:%s127]
  %s129 = scalar_lea.vmem %s0, 8
  %s130 = smov 12
  %v131 = vld [vmem:[%s129] ss:$16 sm:%s130]
  %vm132 = vcmask 1043458
  %v133 = vsel %vm132, %v131, %v128
  %s134 = scalar_lea.vmem %s0, 68
  %v135 = vld [vmem:[%s134] sm:$0x10]
  %vm136 = vcmask 1044484
  %v137 = vsel %vm136, %v135, %v133
  %138 = vrot.lane.b32.xlu0 %v137, 40
  %v139 = vpop.permute.xlu0 %138
  %vm140 = vcmask 367936
  %141 = vst.msk [vmem:[%s1] sm:$0x1f] %vm140, %v139
  %s142 = scalar_lea.vmem %s0, 7
  %s143 = smov 3
  %v144 = vld [vmem:[%s142] ss:$16 sm:%s143]
  %s145 = scalar_lea.vmem %s0, 7
  %s146 = smov 12
  %v147 = vld [vmem:[%s145] ss:$16 sm:%s146]
  %vm148 = vcmask 1043458
  %v149 = vsel %vm148, %v147, %v144
  %s150 = scalar_lea.vmem %s0, 67
  %v151 = vld [vmem:[%s150] sm:$0x10]
  %vm152 = vcmask 1044484
  %v153 = vsel %vm152, %v151, %v149
  %154 = vrot.lane.b32.xlu0 %v153, 35
  %v155 = vpop.permute.xlu0 %154
  %vm156 = vcmask 326936
  %157 = vst.msk [vmem:[%s1] sm:$0x1f] %vm156, %v155
  %s158 = scalar_lea.vmem %s0, 6
  %s159 = smov 3
  %v160 = vld [vmem:[%s158] ss:$16 sm:%s159]
  %s161 = scalar_lea.vmem %s0, 6
  %s162 = smov 12
  %v163 = vld [vmem:[%s161] ss:$16 sm:%s162]
  %vm164 = vcmask 1043458
  %v165 = vsel %vm164, %v163, %v160
  %s166 = scalar_lea.vmem %s0, 66
  %v167 = vld [vmem:[%s166] sm:$0x10]
  %vm168 = vcmask 1044484
  %v169 = vsel %vm168, %v167, %v165
  %170 = vrot.lane.b32.xlu0 %v169, 30
  %v171 = vpop.permute.xlu0 %170
  %vm172 = vcmask 285936
  %173 = vst.msk [vmem:[%s1] sm:$0x1f] %vm172, %v171
  %s174 = scalar_lea.vmem %s0, 5
  %s175 = smov 3
  %v176 = vld [vmem:[%s174] ss:$16 sm:%s175]
  %s177 = scalar_lea.vmem %s0, 5
  %s178 = smov 12
  %v179 = vld [vmem:[%s177] ss:$16 sm:%s178]
  %vm180 = vcmask 1043458
  %v181 = vsel %vm180, %v179, %v176
  %s182 = scalar_lea.vmem %s0, 65
  %v183 = vld [vmem:[%s182] sm:$0x10]
  %vm184 = vcmask 1044484
  %v185 = vsel %vm184, %v183, %v181
  %186 = vrot.lane.b32.xlu0 %v185, 25
  %v187 = vpop.permute.xlu0 %186
  %vm188 = vcmask 244936
  %189 = vst.msk [vmem:[%s1] sm:$0x1f] %vm188, %v187
  %s190 = scalar_lea.vmem %s0, 4
  %s191 = smov 3
  %v192 = vld [vmem:[%s190] ss:$16 sm:%s191]
  %s193 = scalar_lea.vmem %s0, 4
  %s194 = smov 12
  %v195 = vld [vmem:[%s193] ss:$16 sm:%s194]
  %vm196 = vcmask 1043458
  %v197 = vsel %vm196, %v195, %v192
  %s198 = scalar_lea.vmem %s0, 64
  %v199 = vld [vmem:[%s198] sm:$0x10]
  %vm200 = vcmask 1044484
  %v201 = vsel %vm200, %v199, %v197
  %202 = vrot.lane.b32.xlu0 %v201, 20
  %v203 = vpop.permute.xlu0 %202
  %vm204 = vcmask 203936
  %205 = vst.msk [vmem:[%s1] sm:$0x1f] %vm204, %v203
  %s206 = scalar_lea.vmem %s0, 3
  %s207 = smov 3
  %v208 = vld [vmem:[%s206] ss:$16 sm:%s207]
  %s209 = scalar_lea.vmem %s0, 3
  %s210 = smov 12
  %v211 = vld [vmem:[%s209] ss:$16 sm:%s210]
  %vm212 = vcmask 1043458
  %v213 = vsel %vm212, %v211, %v208
  %s214 = scalar_lea.vmem %s0, 63
  %v215 = vld [vmem:[%s214] sm:$0x10]
  %vm216 = vcmask 1044484
  %v217 = vsel %vm216, %v215, %v213
  %218 = vrot.lane.b32.xlu0 %v217, 15
  %v219 = vpop.permute.xlu0 %218
  %vm220 = vcmask 162936
  %221 = vst.msk [vmem:[%s1] sm:$0x1f] %vm220, %v219
  %s222 = scalar_lea.vmem %s0, 2
  %s223 = smov 3
  %v224 = vld [vmem:[%s222] ss:$16 sm:%s223]
  %s225 = scalar_lea.vmem %s0, 2
  %s226 = smov 12
  %v227 = vld [vmem:[%s225] ss:$16 sm:%s226]
  %vm228 = vcmask 1043458
  %v229 = vsel %vm228, %v227, %v224
  %s230 = scalar_lea.vmem %s0, 62
  %v231 = vld [vmem:[%s230] sm:$0x10]
  %vm232 = vcmask 1044484
  %v233 = vsel %vm232, %v231, %v229
  %234 = vrot.lane.b32.xlu0 %v233, 10
  %v235 = vpop.permute.xlu0 %234
  %vm236 = vcmask 121936
  %237 = vst.msk [vmem:[%s1] sm:$0x1f] %vm236, %v235
  %s238 = scalar_lea.vmem %s0, 1
  %s239 = smov 3
  %v240 = vld [vmem:[%s238] ss:$16 sm:%s239]
  %s241 = scalar_lea.vmem %s0, 1
  %s242 = smov 12
  %v243 = vld [vmem:[%s241] ss:$16 sm:%s242]
  %vm244 = vcmask 1043458
  %v245 = vsel %vm244, %v243, %v240
  %s246 = scalar_lea.vmem %s0, 61
  %v247 = vld [vmem:[%s246] sm:$0x10]
  %vm248 = vcmask 1044484
  %v249 = vsel %vm248, %v247, %v245
  %250 = vrot.lane.b32.xlu0 %v249, 5
  %v251 = vpop.permute.xlu0 %250
  %vm252 = vcmask 80936
  %253 = vst.msk [vmem:[%s1] sm:$0x1f] %vm252, %v251

// kernel: div.9
$region0: #{div.9}
  #allocation0 [shape = 's32[1]{0}', space=sflag, size = 0x4, scoped, tag = 'scoped memory for div.9']
  %s0 = inlined_call_operand.vmem [shape: f32[16,5], index: 0, kind: input, shape index: {}]
  %s1 = inlined_call_operand.vmem [shape: f32[16,5], index: 1, kind: input, shape index: {}]
  %s2 = inlined_call_operand.vmem [shape: f32[16,5], index: 2, kind: output, shape index: {}]
  %v3 = vld [vmem:[%s0] sm:$0x1f]
  %v4 = vld [vmem:[%s1] sm:$0x1f]
  %5 = xla_tuple %v3, %v4
  %6 = xla_tuple %5
  %v7 = vrcp.pop %v4
  %v8 = vmul.f32 %v3, %v7
  %9 = xla_tuple %v8
  %10 = vst [vmem:[%s2] sm:$0xff] %v8

// kernel: cost_fn.1
$region0: #{cost_fn.1}
  #allocation0 [shape = 'u32[]', space=smem, size = 0x4, offset = 0x4, fixed_abs, tag = 'smem constant byte address 0x4 - core index']
  #allocation1 [shape = 'u32[144,128]{1,0:T(1,128)}', space=vmem, size = 0x12000, scoped, tag = 'internal scratch']
  %s0 = inlined_call_operand.vmem [shape: f32[16,16], index: 0, kind: input, shape index: {}]
  %s1 = inlined_call_operand.vmem [shape: f32[16,8], index: 1, kind: input, shape index: {}]
  %s2 = inlined_call_operand.vmem [shape: s32[1,128], index: 2, kind: input, shape index: {}]
  %s3 = inlined_call_operand.vmem [shape: f32[8,128], index: 3, kind: input, shape index: {}]
  %s4 = inlined_call_operand.vmem [shape: f32[16,128], index: 4, kind: input, shape index: {}]
  %s5 = inlined_call_operand.vmem [shape: f32[16,128], index: 5, kind: output, shape index: {}]
  %s6 = sld [smem:[#allocation0]]
  $region53: #{cost_fn.1} parent=0
    _
  %s8 = ssub.s32 1, %s6
  %s9 = scalar_select 0, %s8, %s6
  loop: start=0, step=1, limit=4
  $region2: #{cost_fn.1} parent=0 // loop_pre_header
    _
  $region3: #{cost_fn.1} parent=0 // loop_header
    %s11 = sphi 0, %s15
    %p12 = scmp.ge.s32.totalorder %s11, 4
    %s18 = sphi 0, %s30
    %s19 = sphi 0, %s26
    %s20 = sphi 0, %s18
    %s21 = sphi 0, %s19
    %s22 = sphi 0, %s20
    %s23 = sphi 0, %s21
    %s33 = sphi 0, %s35
    %s36 = sphi 0, %s33
    %s37 = sphi 0, %s36
    %s53 = sphi 0, %s37
    %s59 = sphi 0, %s61
    %s62 = sphi 0, %s59
    %s63 = sphi 0, %s62
    %s79 = sphi 0, %s63
    %s85 = sphi 0, %s87
    %s88 = sphi 0, %s85
    %s89 = sphi 0, %s88
    %s105 = sphi 0, %s89
    %s111 = sphi 0, %s113
    %s114 = sphi 0, %s111
    %s115 = sphi 0, %s114
    %s131 = sphi 0, %s115
    %s139 = sphi 0, %s141
    %s142 = sphi 0, %s139
    %s143 = sphi 0, %s142
    %s159 = sphi 0, %s143
    %s167 = sphi 0, %s169
    %s170 = sphi 0, %s167
    %s171 = sphi 0, %s170
    %s187 = sphi 0, %s171
  $region4: #{cost_fn.1} parent=0 // loop_header_branch
    %14 = sbr.rel (%p12) target = $region8
  $region5: #{cost_fn.1} parent=0 // loop_body
    %s16 = ssub.s32 %s11, 1
    %s17 = ssub.s32 %s11, 2
    %s24 = sadd.s32 1, %s19
    %p25 = scmp.ge.s32.totalorder %s24, 1
    %s26 = scalar_select %p25, 0, %s24
    %s27 = sadd.s32 1, %s18
    %s28 = scalar_select %p25, %s27, %s18
    %p29 = scmp.ge.s32.totalorder %s28, 2
    %s30 = scalar_select %p29, 0, %s28
    %s31 = ssub.s32 %s18, %s30
    %p32 = scmp.eq.s32.totalorder %s31, 0
    %s34 = sadd.s32 %s33, 1
    %s35 = scalar_select %p32, %s33, %s34
    %p38 = pneg %p32
    %p39 = scmp.eq.s32.totalorder %s11, 1
    %p40 = por %p38, %p39
    %p41 = scmp.ne.s32.totalorder %s33, %s36
    %p42 = scmp.eq.s32.totalorder %s11, 0
    %p43 = por %p41, %p42
    %p44 = scmp.ne.s32.totalorder %s33, %s36
    %p45 = scmp.eq.s32.totalorder %s16, 1
    %p46 = por %p44, %p45
    %p47 = scmp.ne.s32.totalorder %s36, %s37
    %p48 = scmp.eq.s32.totalorder %s16, 0
    %p49 = por %p47, %p48
    %p50 = scmp.ne.s32.totalorder %s36, %s37
    %p51 = scmp.eq.s32.totalorder %s17, 1
    %p52 = por %p50, %p51
    %p54 = scmp.ne.s32.totalorder %s37, %s53
    %p55 = scmp.eq.s32.totalorder %s17, 0
    %p56 = por %p54, %p55
    %s57 = ssub.s32 %s18, %s30
    %p58 = scmp.eq.s32.totalorder %s57, 0
    %s60 = sadd.s32 %s59, 1
    %s61 = scalar_select %p58, %s59, %s60
    %p64 = pneg %p58
    %p65 = scmp.eq.s32.totalorder %s11, 1
    %p66 = por %p64, %p65
    %p67 = scmp.ne.s32.totalorder %s59, %s62
    %p68 = scmp.eq.s32.totalorder %s11, 0
    %p69 = por %p67, %p68
    %p70 = scmp.ne.s32.totalorder %s59, %s62
    %p71 = scmp.eq.s32.totalorder %s16, 1
    %p72 = por %p70, %p71
    %p73 = scmp.ne.s32.totalorder %s62, %s63
    %p74 = scmp.eq.s32.totalorder %s16, 0
    %p75 = por %p73, %p74
    %p76 = scmp.ne.s32.totalorder %s62, %s63
    %p77 = scmp.eq.s32.totalorder %s17, 1
    %p78 = por %p76, %p77
    %p80 = scmp.ne.s32.totalorder %s63, %s79
    %p81 = scmp.eq.s32.totalorder %s17, 0
    %p82 = por %p80, %p81
    %s83 = ssub.s32 %s19, %s26
    %p84 = scmp.eq.s32.totalorder %s83, 0
    %s86 = sadd.s32 %s85, 1
    %s87 = scalar_select %p84, %s85, %s86
    %p90 = pneg %p84
    %p91 = scmp.eq.s32.totalorder %s11, 1
    %p92 = por %p90, %p91
    %p93 = scmp.ne.s32.totalorder %s85, %s88
    %p94 = scmp.eq.s32.totalorder %s11, 0
    %p95 = por %p93, %p94
    %p96 = scmp.ne.s32.totalorder %s85, %s88
    %p97 = scmp.eq.s32.totalorder %s16, 1
    %p98 = por %p96, %p97
    %p99 = scmp.ne.s32.totalorder %s88, %s89
    %p100 = scmp.eq.s32.totalorder %s16, 0
    %p101 = por %p99, %p100
    %p102 = scmp.ne.s32.totalorder %s88, %s89
    %p103 = scmp.eq.s32.totalorder %s17, 1
    %p104 = por %p102, %p103
    %p106 = scmp.ne.s32.totalorder %s89, %s105
    %p107 = scmp.eq.s32.totalorder %s17, 0
    %p108 = por %p106, %p107
    %s109 = ssub.s32 %s19, %s26
    %p110 = scmp.eq.s32.totalorder %s109, 0
    %s112 = sadd.s32 %s111, 1
    %s113 = scalar_select %p110, %s111, %s112
    %p116 = pneg %p110
    %p117 = scmp.eq.s32.totalorder %s11, 1
    %p118 = por %p116, %p117
    %p119 = scmp.ne.s32.totalorder %s111, %s114
    %p120 = scmp.eq.s32.totalorder %s11, 0
    %p121 = por %p119, %p120
    %p122 = scmp.ne.s32.totalorder %s111, %s114
    %p123 = scmp.eq.s32.totalorder %s16, 1
    %p124 = por %p122, %p123
    %p125 = scmp.ne.s32.totalorder %s114, %s115
    %p126 = scmp.eq.s32.totalorder %s16, 0
    %p127 = por %p125, %p126
    %p128 = scmp.ne.s32.totalorder %s114, %s115
    %p129 = scmp.eq.s32.totalorder %s17, 1
    %p130 = por %p128, %p129
    %p132 = scmp.ne.s32.totalorder %s115, %s131
    %p133 = scmp.eq.s32.totalorder %s17, 0
    %p134 = por %p132, %p133
    %s135 = ssub.s32 %s18, %s30
    %s136 = ssub.s32 %s19, %s26
    %s137 = sor.u32 %s135, %s136
    %p138 = scmp.eq.s32.totalorder %s137, 0
    %s140 = sadd.s32 %s139, 1
    %s141 = scalar_select %p138, %s139, %s140
    %p144 = pneg %p138
    %p145 = scmp.eq.s32.totalorder %s11, 1
    %p146 = por %p144, %p145
    %p147 = scmp.ne.s32.totalorder %s139, %s142
    %p148 = scmp.eq.s32.totalorder %s11, 0
    %p149 = por %p147, %p148
    %p150 = scmp.ne.s32.totalorder %s139, %s142
    %p151 = scmp.eq.s32.totalorder %s16, 1
    %p152 = por %p150, %p151
    %p153 = scmp.ne.s32.totalorder %s142, %s143
    %p154 = scmp.eq.s32.totalorder %s16, 0
    %p155 = por %p153, %p154
    %p156 = scmp.ne.s32.totalorder %s142, %s143
    %p157 = scmp.eq.s32.totalorder %s17, 1
    %p158 = por %p156, %p157
    %p160 = scmp.ne.s32.totalorder %s143, %s159
    %p161 = scmp.eq.s32.totalorder %s17, 0
    %p162 = por %p160, %p161
    %s163 = ssub.s32 %s18, %s30
    %s164 = ssub.s32 %s19, %s26
    %s165 = sor.u32 %s163, %s164
    %p166 = scmp.eq.s32.totalorder %s165, 0
    %s168 = sadd.s32 %s167, 1
    %s169 = scalar_select %p166, %s167, %s168
    %p172 = pneg %p166
    %p173 = scmp.eq.s32.totalorder %s11, 1
    %p174 = por %p172, %p173
    %p175 = scmp.ne.s32.totalorder %s167, %s170
    %p176 = scmp.eq.s32.totalorder %s11, 0
    %p177 = por %p175, %p176
    %p178 = scmp.ne.s32.totalorder %s167, %s170
    %p179 = scmp.eq.s32.totalorder %s16, 1
    %p180 = por %p178, %p179
    %p181 = scmp.ne.s32.totalorder %s170, %s171
    %p182 = scmp.eq.s32.totalorder %s16, 0
    %p183 = por %p181, %p182
    %p184 = scmp.ne.s32.totalorder %s170, %s171
    %p185 = scmp.eq.s32.totalorder %s17, 1
    %p186 = por %p184, %p185
    %p188 = scmp.ne.s32.totalorder %s171, %s187
    %p189 = scmp.eq.s32.totalorder %s17, 0
    %p190 = por %p188, %p189
    %p191 = scmp.le.s32.totalorder 1, %s11
    %p192 = scmp.lt.s32.totalorder %s11, 3
    %p193 = pnand %p191, %p192
    %p194 = pneg %p193
    // Predicated region
    $region9: #{cost_fn.1} parent=5 // pred_check
      _
    $region10: #{cost_fn.1} parent=5 // pred_check_branch
      %196 = sbr.rel (%p193) target = $region12
    $region11: #{cost_fn.1} parent=5 // pred_region
      %s197 = ssub.s32 %s11, 1
      // Predicated region
      $region13: #{cost_fn.1} parent=11 // pred_check
        %p198 = pneg %p101
      $region14: #{cost_fn.1} parent=11 // pred_check_branch
        %200 = sbr.rel (%p198) target = $region16
      $region15: #{cost_fn.1} parent=11 // pred_region
        %p201 = scmp.lt.s32.totalorder %s21, 0
        %s202 = scalar_select %p201, %s21, 0
        %s203 = scalar_lea.vmem %s2, %s202
      $region16: #{cost_fn.1} parent=11 // pred_fallthru
        _
      // Predicated region
      $region17: #{cost_fn.1} parent=11 // pred_check
        %p204 = pneg %p127
      $region18: #{cost_fn.1} parent=11 // pred_check_branch
        %206 = sbr.rel (%p204) target = $region20
      $region19: #{cost_fn.1} parent=11 // pred_region
        %p207 = scmp.lt.s32.totalorder %s21, 0
        %s208 = scalar_select %p207, %s21, 0
        %s209 = smul.addr %s208, 8
        %s210 = scalar_lea.vmem %s3, %s209
      $region20: #{cost_fn.1} parent=11 // pred_fallthru
        _
    $region12: #{cost_fn.1} parent=5 // pred_fallthru
      _
    %p211 = scmp.lt.s32.totalorder %s11, 2
    // Predicated region
    $region21: #{cost_fn.1} parent=5 // pred_check
      %p212 = pneg %p211
    $region22: #{cost_fn.1} parent=5 // pred_check_branch
      %214 = sbr.rel (%p212) target = $region24
    $region23: #{cost_fn.1} parent=5 // pred_region
      // Predicated region
      $region25: #{cost_fn.1} parent=23 // pred_check
        %p215 = pneg %p43
      $region26: #{cost_fn.1} parent=23 // pred_check_branch
        %217 = sbr.rel (%p215) target = $region28
      $region27: #{cost_fn.1} parent=23 // pred_region
        %p218 = scmp.lt.s32.totalorder %s18, 1
        %s219 = scalar_select %p218, %s18, 1
        %s220 = smul.addr %s219, 8
        %s221 = scalar_lea.vmem %s0, %s220
      $region28: #{cost_fn.1} parent=23 // pred_fallthru
        _
      // Predicated region
      $region29: #{cost_fn.1} parent=23 // pred_check
        %p222 = pneg %p69
      $region30: #{cost_fn.1} parent=23 // pred_check_branch
        %224 = sbr.rel (%p222) target = $region32
      $region31: #{cost_fn.1} parent=23 // pred_region
        %p225 = scmp.lt.s32.totalorder %s18, 1
        %s226 = scalar_select %p225, %s18, 1
        %s227 = smul.addr %s226, 8
        %s228 = scalar_lea.vmem %s1, %s227
      $region32: #{cost_fn.1} parent=23 // pred_fallthru
        _
      // Predicated region
      $region33: #{cost_fn.1} parent=23 // pred_check
        %p229 = pneg %p149
      $region34: #{cost_fn.1} parent=23 // pred_check_branch
        %231 = sbr.rel (%p229) target = $region36
      $region35: #{cost_fn.1} parent=23 // pred_region
        %p232 = scmp.lt.s32.totalorder %s18, 1
        %s233 = scalar_select %p232, %s18, 1
        %p234 = scmp.lt.s32.totalorder %s19, 0
        %s235 = scalar_select %p234, %s19, 0
        %s236 = sadd.s32 %s235, %s233
        %s237 = smul.addr %s236, 8
        %s238 = scalar_lea.vmem %s4, %s237
      $region36: #{cost_fn.1} parent=23 // pred_fallthru
        _
    $region24: #{cost_fn.1} parent=5 // pred_fallthru
      _
    %p239 = scmp.le.s32.totalorder 1, %s11
    %p240 = scmp.lt.s32.totalorder %s11, 3
    %p241 = pnand %p239, %p240
    %p242 = pneg %p241
    // Predicated region
    $region37: #{cost_fn.1} parent=5 // pred_check
      _
    $region38: #{cost_fn.1} parent=5 // pred_check_branch
      %244 = sbr.rel (%p241) target = $region40
    $region39: #{cost_fn.1} parent=5 // pred_region
      %s245 = ssub.s32 %s11, 1
      %p246 = scmp.lt.s32.totalorder %s20, 1
      %s247 = scalar_select %p246, %s20, 1
      %s248 = smul.addr %s247, 8
      %s249 = scalar_lea.vmem %s0, %s248
      %p250 = pneg %p49
      %p251 = pneg %p46
      %p252 = scmp.lt.s32.totalorder %s20, 1
      %s253 = scalar_select %p252, %s20, 1
      %s254 = smul.addr %s253, 8
      %s255 = scalar_lea.vmem %s1, %s254
      %p256 = pneg %p75
      %p257 = pneg %p72
      %p258 = scmp.lt.s32.totalorder %s21, 0
      %s259 = scalar_select %p258, %s21, 0
      %s260 = scalar_lea.vmem %s2, %s259
      %p261 = pneg %p101
      %p262 = pneg %p98
      %p263 = scmp.lt.s32.totalorder %s21, 0
      %s264 = scalar_select %p263, %s21, 0
      %s265 = smul.addr %s264, 8
      %s266 = scalar_lea.vmem %s3, %s265
      %p267 = pneg %p127
      %p268 = pneg %p124
      %p269 = scmp.lt.s32.totalorder %s20, 1
      %s270 = scalar_select %p269, %s20, 1
      %p271 = scmp.lt.s32.totalorder %s21, 0
      %s272 = scalar_select %p271, %s21, 0
      %s273 = sadd.s32 %s272, %s270
      %s274 = smul.addr %s273, 8
      %s275 = scalar_lea.vmem %s4, %s274
      %p276 = pneg %p155
      %p277 = pneg %p152
      %p278 = pneg %p183
      %p279 = pneg %p180
      %p280 = scmp.lt.s32.totalorder %s20, 1
      %s281 = scalar_select %p280, %s20, 1
      %p282 = scmp.lt.s32.totalorder %s21, 0
      %s283 = scalar_select %p282, %s21, 0
      %s284 = sadd.s32 %s283, %s281
      %s285 = smul.addr %s284, 8
      %s286 = scalar_lea.vmem %s5, %s285
      %p287 = scmp.lt.s32.totalorder %s20, 1
      %s288 = scalar_select %p287, %s20, 1
      %s289 = smul.addr %s288, 8
      %s290 = scalar_lea.vmem %s0, %s289
      %p291 = scmp.lt.s32.totalorder %s20, 1
      %s292 = scalar_select %p291, %s20, 1
      %s293 = smul.addr %s292, 8
      %s294 = scalar_lea.vmem %s1, %s293
      %p295 = scmp.lt.s32.totalorder %s21, 0
      %s296 = scalar_select %p295, %s21, 0
      %s297 = scalar_lea.vmem %s2, %s296
      %p298 = scmp.lt.s32.totalorder %s21, 0
      %s299 = scalar_select %p298, %s21, 0
      %s300 = smul.addr %s299, 8
      %s301 = scalar_lea.vmem %s3, %s300
      %p302 = scmp.lt.s32.totalorder %s20, 1
      %s303 = scalar_select %p302, %s20, 1
      %p304 = scmp.lt.s32.totalorder %s21, 0
      %s305 = scalar_select %p304, %s21, 0
      %s306 = sadd.s32 %s305, %s303
      %s307 = smul.addr %s306, 8
      %s308 = scalar_lea.vmem %s4, %s307
      %p309 = scmp.lt.s32.totalorder %s20, 1
      %s310 = scalar_select %p309, %s20, 1
      %p311 = scmp.lt.s32.totalorder %s21, 0
      %s312 = scalar_select %p311, %s21, 0
      %s313 = sadd.s32 %s312, %s310
      %s314 = smul.addr %s313, 8
      %s315 = scalar_lea.vmem %s5, %s314
      %v316 = vld [vmem:[%s297] sm:$0x1]
      %v317 = vld [vmem:[%s290] sm:$0xff]
      %v318 = vlaneseq
      %v319 = vshrl.u32 %v318, 7
      %v320 = vadd.s32 %v319, 8
      %v321 = vlaneseq
      %v322 = vshrl.u32 %v321, 7
      %v323 = vsub.s32 0, %v322
      %v324 = vrot.slane %v316, %v323
      %vm325 = vcmp.eq.s32.totalorder %v319, %v324
      %vm326 = vcmp.eq.s32.totalorder %v320, %v324
      %v327 = vsel %vm325, 1, 0
      %v328 = vsel %vm326, 1, 0
      %v329 = vcvt.s32.f32 %v327
      %v330 = vcvt.s32.f32 %v328
      %v331 = vand.u32 2147483647, %v317
      %v332 = vsub.f32 0.0, %v331
      %v333 = vmul.f32 %v332, 1.442695
      %v334 = vpow.pop %v333
      %v335 = vadd.f32 %v334, 1.0
      %v336 = vrcp.pop %v335
      %vm337 = vcmp.ge.f32.partialorder %v317, 0.0
      %v338 = vmul.f32 %v334, %v336
      %v339 = vsel %vm337, %v336, %v338
      %v340 = vsub.f32 1.0, %v339
      %v341 = vlog2.pop %v335
      %v342 = vmul.f32 %v341, 0.6931472
      %v343 = vsub.f32 0.0, %v317
      %v344 = vmax.f32 %v343, 0.0
      %v345 = vadd.f32 %v344, %v342
      %v346 = vmax.f32 %v317, 0.0
      %v347 = vadd.f32 %v346, %v342
      %v348 = vmul.f32 %v339, %v339
      %v349 = vmul.f32 %v340, %v340
      %v350 = vmul.f32 %v349, 0.25
      %v351 = vmul.f32 %v350, %v345
      %v352 = vmul.f32 %v348, 0.75
      %v353 = vmul.f32 %v352, %v347
      %v354 = vsub.f32 %v351, %v353
      %vm355 = vcmask 130048
      %v357 = vsel %vm355, %v354, 0
      %359 = vmatprep.subr.mxu0 0.0
      %360 = vmatpush1.msra.mxu0 0.0
      %361 = vmatprep.subr.mxu0 0.0
      %362 = vmatpush1.msra.mxu0 0.0
      %363 = vmatprep.subr.mxu0 0.0
      %364 = vmatpush1.msra.mxu0 0.0
      %365 = vmatprep.subr.mxu0 0.0
      %366 = vmatpush1.msra.mxu0 0.0
      %367 = vmatprep.subr.mxu0 0.0
      %368 = vmatpush1.msra.mxu0 0.0
      %369 = vmatprep.subr.mxu0 0.0
      %370 = vmatpush1.msra.mxu0 0.0
      %371 = vmatprep.subr.mxu0 0.0
      %372 = vmatpush1.msra.mxu0 0.0
      %373 = vmatprep.subr.mxu0 0.0
      %374 = vmatpush1.msra.mxu0 0.0
      %375 = vmatprep.subr.mxu0 0.0
      %376 = vmatpush1.msra.mxu0 0.0
      %377 = vmatprep.subr.mxu0 0.0
      %378 = vmatpush1.msra.mxu0 0.0
      %379 = vmatprep.subr.mxu0 0.0
      %380 = vmatpush1.msra.mxu0 0.0
      %381 = vmatprep.subr.mxu0 0.0
      %382 = vmatpush1.msra.mxu0 0.0
      %383 = vmatprep.subr.mxu0 0.0
      %384 = vmatpush1.msra.mxu0 0.0
      %385 = vmatprep.subr.mxu0 0.0
      %386 = vmatpush1.msra.mxu0 0.0
      %387 = vmatprep.subr.mxu0 0.0
      %v388 = vand.u32 %v330, 4294901760
      %389 = vmatpush1.msra.mxu0 %v388
      %390 = vmatprep.subr.mxu0 0.0
      %v391 = vand.u32 %v329, 4294901760
      %392 = vmatpush1.msra.mxu0 %v391
      %393 = vmatprep.subr.mxu0 0.0
      %394 = vmatpush2.msra.mxu0 0.0
      %395 = vmatprep.subr.mxu0 0.0
      %396 = vmatpush2.msra.mxu0 0.0
      %397 = vmatprep.subr.mxu0 0.0
      %398 = vmatpush2.msra.mxu0 0.0
      %399 = vmatprep.subr.mxu0 0.0
      %400 = vmatpush2.msra.mxu0 0.0
      %401 = vmatprep.subr.mxu0 0.0
      %402 = vmatpush2.msra.mxu0 0.0
      %403 = vmatprep.subr.mxu0 0.0
      %404 = vmatpush2.msra.mxu0 0.0
      %405 = vmatprep.subr.mxu0 0.0
      %406 = vmatpush2.msra.mxu0 0.0
      %407 = vmatprep.subr.mxu0 0.0
      %408 = vmatpush2.msra.mxu0 0.0
      %409 = vmatprep.subr.mxu0 0.0
      %410 = vmatpush2.msra.mxu0 0.0
      %411 = vmatprep.subr.mxu0 0.0
      %412 = vmatpush2.msra.mxu0 0.0
      %413 = vmatprep.subr.mxu0 0.0
      %414 = vmatpush2.msra.mxu0 0.0
      %415 = vmatprep.subr.mxu0 0.0
      %416 = vmatpush2.msra.mxu0 0.0
      %417 = vmatprep.subr.mxu0 0.0
      %418 = vmatpush2.msra.mxu0 0.0
      %419 = vmatprep.subr.mxu0 0.0
      %420 = vmatpush2.msra.mxu0 0.0
      %421 = vmatprep.subr.mxu0 0.0
      %422 = vmatpush2.msra.mxu0 0.0
      %423 = vmatprep.subr.mxu0 0.0
      %424 = vmatpush2.msra.mxu0 0.0
      %425 = vmatprep.mubr.f32.mxu0 0.0
      %v426 = vand.u32 %v357, 4294901760
      %v427 = vsub.f32 %v357, %v426
      %v428 = vand.u32 %v427, 4294901760
      %v429 = vsub.f32 %v427, %v428
      %v430 = vand.u32 %v429, 4294901760
      %431 = vmatmul.mubr.f32.gmra.mxu0 %v430
      %v432 = vpop.f32.mrf.mxu0
      %v433 = vadd.f32 0.0, %v432
      %v434 = vpop.f32.mrf.mxu0
      %435 = vdwg.mxu0
      %436 = vmatprep.subr.mxu0 0.0
      %437 = vmatpush1.msra.mxu0 0.0
      %438 = vmatprep.subr.mxu0 0.0
      %439 = vmatpush1.msra.mxu0 0.0
      %440 = vmatprep.subr.mxu0 0.0
      %441 = vmatpush1.msra.mxu0 0.0
      %442 = vmatprep.subr.mxu0 0.0
      %443 = vmatpush1.msra.mxu0 0.0
      %444 = vmatprep.subr.mxu0 0.0
      %445 = vmatpush1.msra.mxu0 0.0
      %446 = vmatprep.subr.mxu0 0.0
      %447 = vmatpush1.msra.mxu0 0.0
      %448 = vmatprep.subr.mxu0 0.0
      %449 = vmatpush1.msra.mxu0 0.0
      %450 = vmatprep.subr.mxu0 0.0
      %451 = vmatpush1.msra.mxu0 0.0
      %452 = vmatprep.subr.mxu0 0.0
      %453 = vmatpush1.msra.mxu0 0.0
      %454 = vmatprep.subr.mxu0 0.0
      %455 = vmatpush1.msra.mxu0 0.0
      %456 = vmatprep.subr.mxu0 0.0
      %457 = vmatpush1.msra.mxu0 0.0
      %458 = vmatprep.subr.mxu0 0.0
      %459 = vmatpush1.msra.mxu0 0.0
      %460 = vmatprep.subr.mxu0 0.0
      %461 = vmatpush1.msra.mxu0 0.0
      %462 = vmatprep.subr.mxu0 0.0
      %463 = vmatpush1.msra.mxu0 0.0
      %464 = vmatprep.subr.mxu0 0.0
      %v465 = vand.u32 %v330, 4294901760
      %v466 = vsub.f32 %v330, %v465
      %v467 = vand.u32 %v466, 4294901760
      %v468 = vsub.f32 %v466, %v467
      %v469 = vand.u32 %v468, 4294901760
      %470 = vmatpush1.msra.mxu0 %v469
      %471 = vmatprep.subr.mxu0 0.0
      %v472 = vand.u32 %v329, 4294901760
      %v473 = vsub.f32 %v329, %v472
      %v474 = vand.u32 %v473, 4294901760
      %v475 = vsub.f32 %v473, %v474
      %v476 = vand.u32 %v475, 4294901760
      %477 = vmatpush1.msra.mxu0 %v476
      %478 = vmatprep.subr.mxu0 0.0
      %479 = vmatpush2.msra.mxu0 0.0
      %480 = vmatprep.subr.mxu0 0.0
      %481 = vmatpush2.msra.mxu0 0.0
      %482 = vmatprep.subr.mxu0 0.0
      %483 = vmatpush2.msra.mxu0 0.0
      %484 = vmatprep.subr.mxu0 0.0
      %485 = vmatpush2.msra.mxu0 0.0
      %486 = vmatprep.subr.mxu0 0.0
      %487 = vmatpush2.msra.mxu0 0.0
      %488 = vmatprep.subr.mxu0 0.0
      %489 = vmatpush2.msra.mxu0 0.0
      %490 = vmatprep.subr.mxu0 0.0
      %491 = vmatpush2.msra.mxu0 0.0
      %492 = vmatprep.subr.mxu0 0.0
      %493 = vmatpush2.msra.mxu0 0.0
      %494 = vmatprep.subr.mxu0 0.0
      %495 = vmatpush2.msra.mxu0 0.0
      %496 = vmatprep.subr.mxu0 0.0
      %497 = vmatpush2.msra.mxu0 0.0
      %498 = vmatprep.subr.mxu0 0.0
      %499 = vmatpush2.msra.mxu0 0.0
      %500 = vmatprep.subr.mxu0 0.0
      %501 = vmatpush2.msra.mxu0 0.0
      %502 = vmatprep.subr.mxu0 0.0
      %503 = vmatpush2.msra.mxu0 0.0
      %504 = vmatprep.subr.mxu0 0.0
      %505 = vmatpush2.msra.mxu0 0.0
      %506 = vmatprep.subr.mxu0 0.0
      %507 = vmatpush2.msra.mxu0 0.0
      %508 = vmatprep.subr.mxu0 0.0
      %509 = vmatpush2.msra.mxu0 0.0
      %510 = vmatprep.mubr.f32.mxu0 0.0
      %v511 = vand.u32 %v357, 4294901760
      %512 = vmatmul.mubr.f32.gmra.mxu0 %v511
      %v513 = vpop.f32.mrf.mxu0
      %v514 = vadd.f32 %v433, %v513
      %v515 = vpop.f32.mrf.mxu0
      %516 = vdwg.mxu0
      %517 = vmatprep.subr.mxu0 0.0
      %518 = vmatpush1.msra.mxu0 0.0
      %519 = vmatprep.subr.mxu0 0.0
      %520 = vmatpush1.msra.mxu0 0.0
      %521 = vmatprep.subr.mxu0 0.0
      %522 = vmatpush1.msra.mxu0 0.0
      %523 = vmatprep.subr.mxu0 0.0
      %524 = vmatpush1.msra.mxu0 0.0
      %525 = vmatprep.subr.mxu0 0.0
      %526 = vmatpush1.msra.mxu0 0.0
      %527 = vmatprep.subr.mxu0 0.0
      %528 = vmatpush1.msra.mxu0 0.0
      %529 = vmatprep.subr.mxu0 0.0
      %530 = vmatpush1.msra.mxu0 0.0
      %531 = vmatprep.subr.mxu0 0.0
      %532 = vmatpush1.msra.mxu0 0.0
      %533 = vmatprep.subr.mxu0 0.0
      %534 = vmatpush1.msra.mxu0 0.0
      %535 = vmatprep.subr.mxu0 0.0
      %536 = vmatpush1.msra.mxu0 0.0
      %537 = vmatprep.subr.mxu0 0.0
      %538 = vmatpush1.msra.mxu0 0.0
      %539 = vmatprep.subr.mxu0 0.0
      %540 = vmatpush1.msra.mxu0 0.0
      %541 = vmatprep.subr.mxu0 0.0
      %542 = vmatpush1.msra.mxu0 0.0
      %543 = vmatprep.subr.mxu0 0.0
      %544 = vmatpush1.msra.mxu0 0.0
      %545 = vmatprep.subr.mxu0 0.0
      %v546 = vand.u32 %v330, 4294901760
      %v547 = vsub.f32 %v330, %v546
      %548 = vmatpush1.msra.mxu0 %v547
      %549 = vmatprep.subr.mxu0 0.0
      %v550 = vand.u32 %v329, 4294901760
      %v551 = vsub.f32 %v329, %v550
      %552 = vmatpush1.msra.mxu0 %v551
      %553 = vmatprep.subr.mxu0 0.0
      %554 = vmatpush2.msra.mxu0 0.0
      %555 = vmatprep.subr.mxu0 0.0
      %556 = vmatpush2.msra.mxu0 0.0
      %557 = vmatprep.subr.mxu0 0.0
      %558 = vmatpush2.msra.mxu0 0.0
      %559 = vmatprep.subr.mxu0 0.0
      %560 = vmatpush2.msra.mxu0 0.0
      %561 = vmatprep.subr.mxu0 0.0
      %562 = vmatpush2.msra.mxu0 0.0
      %563 = vmatprep.subr.mxu0 0.0
      %564 = vmatpush2.msra.mxu0 0.0
      %565 = vmatprep.subr.mxu0 0.0
      %566 = vmatpush2.msra.mxu0 0.0
      %567 = vmatprep.subr.mxu0 0.0
      %568 = vmatpush2.msra.mxu0 0.0
      %569 = vmatprep.subr.mxu0 0.0
      %570 = vmatpush2.msra.mxu0 0.0
      %571 = vmatprep.subr.mxu0 0.0
      %572 = vmatpush2.msra.mxu0 0.0
      %573 = vmatprep.subr.mxu0 0.0
      %574 = vmatpush2.msra.mxu0 0.0
      %575 = vmatprep.subr.mxu0 0.0
      %576 = vmatpush2.msra.mxu0 0.0
      %577 = vmatprep.subr.mxu0 0.0
      %578 = vmatpush2.msra.mxu0 0.0
      %579 = vmatprep.subr.mxu0 0.0
      %580 = vmatpush2.msra.mxu0 0.0
      %581 = vmatprep.subr.mxu0 0.0
      %582 = vmatpush2.msra.mxu0 0.0
      %583 = vmatprep.subr.mxu0 0.0
      %584 = vmatpush2.msra.mxu0 0.0
      %585 = vmatprep.mubr.f32.mxu0 0.0
      %v586 = vand.u32 %v357, 4294901760
      %v587 = vsub.f32 %v357, %v586
      %588 = vmatmul.mubr.f32.gmra.mxu0 %v587
      %v589 = vpop.f32.mrf.mxu0
      %v590 = vadd.f32 %v514, %v589
      %v591 = vpop.f32.mrf.mxu0
      %592 = vdwg.mxu0
      %593 = vmatprep.subr.mxu0 0.0
      %594 = vmatpush1.msra.mxu0 0.0
      %595 = vmatprep.subr.mxu0 0.0
      %596 = vmatpush1.msra.mxu0 0.0
      %597 = vmatprep.subr.mxu0 0.0
      %598 = vmatpush1.msra.mxu0 0.0
      %599 = vmatprep.subr.mxu0 0.0
      %600 = vmatpush1.msra.mxu0 0.0
      %601 = vmatprep.subr.mxu0 0.0
      %602 = vmatpush1.msra.mxu0 0.0
      %603 = vmatprep.subr.mxu0 0.0
      %604 = vmatpush1.msra.mxu0 0.0
      %605 = vmatprep.subr.mxu0 0.0
      %606 = vmatpush1.msra.mxu0 0.0
      %607 = vmatprep.subr.mxu0 0.0
      %608 = vmatpush1.msra.mxu0 0.0
      %609 = vmatprep.subr.mxu0 0.0
      %610 = vmatpush1.msra.mxu0 0.0
      %611 = vmatprep.subr.mxu0 0.0
      %612 = vmatpush1.msra.mxu0 0.0
      %613 = vmatprep.subr.mxu0 0.0
      %614 = vmatpush1.msra.mxu0 0.0
      %615 = vmatprep.subr.mxu0 0.0
      %616 = vmatpush1.msra.mxu0 0.0
      %617 = vmatprep.subr.mxu0 0.0
      %618 = vmatpush1.msra.mxu0 0.0
      %619 = vmatprep.subr.mxu0 0.0
      %620 = vmatpush1.msra.mxu0 0.0
      %621 = vmatprep.subr.mxu0 0.0
      %v622 = vand.u32 %v330, 4294901760
      %623 = vmatpush1.msra.mxu0 %v622
      %624 = vmatprep.subr.mxu0 0.0
      %v625 = vand.u32 %v329, 4294901760
      %626 = vmatpush1.msra.mxu0 %v625
      %627 = vmatprep.subr.mxu0 0.0
      %628 = vmatpush2.msra.mxu0 0.0
      %629 = vmatprep.subr.mxu0 0.0
      %630 = vmatpush2.msra.mxu0 0.0
      %631 = vmatprep.subr.mxu0 0.0
      %632 = vmatpush2.msra.mxu0 0.0
      %633 = vmatprep.subr.mxu0 0.0
      %634 = vmatpush2.msra.mxu0 0.0
      %635 = vmatprep.subr.mxu0 0.0
      %636 = vmatpush2.msra.mxu0 0.0
      %637 = vmatprep.subr.mxu0 0.0
      %638 = vmatpush2.msra.mxu0 0.0
      %639 = vmatprep.subr.mxu0 0.0
      %640 = vmatpush2.msra.mxu0 0.0
      %641 = vmatprep.subr.mxu0 0.0
      %642 = vmatpush2.msra.mxu0 0.0
      %643 = vmatprep.subr.mxu0 0.0
      %644 = vmatpush2.msra.mxu0 0.0
      %645 = vmatprep.subr.mxu0 0.0
      %646 = vmatpush2.msra.mxu0 0.0
      %647 = vmatprep.subr.mxu0 0.0
      %648 = vmatpush2.msra.mxu0 0.0
      %649 = vmatprep.subr.mxu0 0.0
      %650 = vmatpush2.msra.mxu0 0.0
      %651 = vmatprep.subr.mxu0 0.0
      %652 = vmatpush2.msra.mxu0 0.0
      %653 = vmatprep.subr.mxu0 0.0
      %654 = vmatpush2.msra.mxu0 0.0
      %655 = vmatprep.subr.mxu0 0.0
      %656 = vmatpush2.msra.mxu0 0.0
      %657 = vmatprep.subr.mxu0 0.0
      %658 = vmatpush2.msra.mxu0 0.0
      %659 = vmatprep.mubr.f32.mxu0 0.0
      %v660 = vand.u32 %v357, 4294901760
      %v661 = vsub.f32 %v357, %v660
      %v662 = vand.u32 %v661, 4294901760
      %663 = vmatmul.mubr.f32.gmra.mxu0 %v662
      %v664 = vpop.f32.mrf.mxu0
      %v665 = vadd.f32 %v590, %v664
      %v666 = vpop.f32.mrf.mxu0
      %667 = vdwg.mxu0
      %668 = vmatprep.subr.mxu0 0.0
      %669 = vmatpush1.msra.mxu0 0.0
      %670 = vmatprep.subr.mxu0 0.0
      %671 = vmatpush1.msra.mxu0 0.0
      %672 = vmatprep.subr.mxu0 0.0
      %673 = vmatpush1.msra.mxu0 0.0
      %674 = vmatprep.subr.mxu0 0.0
      %675 = vmatpush1.msra.mxu0 0.0
      %676 = vmatprep.subr.mxu0 0.0
      %677 = vmatpush1.msra.mxu0 0.0
      %678 = vmatprep.subr.mxu0 0.0
      %679 = vmatpush1.msra.mxu0 0.0
      %680 = vmatprep.subr.mxu0 0.0
      %681 = vmatpush1.msra.mxu0 0.0
      %682 = vmatprep.subr.mxu0 0.0
      %683 = vmatpush1.msra.mxu0 0.0
      %684 = vmatprep.subr.mxu0 0.0
      %685 = vmatpush1.msra.mxu0 0.0
      %686 = vmatprep.subr.mxu0 0.0
      %687 = vmatpush1.msra.mxu0 0.0
      %688 = vmatprep.subr.mxu0 0.0
      %689 = vmatpush1.msra.mxu0 0.0
      %690 = vmatprep.subr.mxu0 0.0
      %691 = vmatpush1.msra.mxu0 0.0
      %692 = vmatprep.subr.mxu0 0.0
      %693 = vmatpush1.msra.mxu0 0.0
      %694 = vmatprep.subr.mxu0 0.0
      %695 = vmatpush1.msra.mxu0 0.0
      %696 = vmatprep.subr.mxu0 0.0
      %v697 = vand.u32 %v330, 4294901760
      %v698 = vsub.f32 %v330, %v697
      %v699 = vand.u32 %v698, 4294901760
      %700 = vmatpush1.msra.mxu0 %v699
      %701 = vmatprep.subr.mxu0 0.0
      %v702 = vand.u32 %v329, 4294901760
      %v703 = vsub.f32 %v329, %v702
      %v704 = vand.u32 %v703, 4294901760
      %705 = vmatpush1.msra.mxu0 %v704
      %706 = vmatprep.subr.mxu0 0.0
      %707 = vmatpush2.msra.mxu0 0.0
      %708 = vmatprep.subr.mxu0 0.0
      %709 = vmatpush2.msra.mxu0 0.0
      %710 = vmatprep.subr.mxu0 0.0
      %711 = vmatpush2.msra.mxu0 0.0
      %712 = vmatprep.subr.mxu0 0.0
      %713 = vmatpush2.msra.mxu0 0.0
      %714 = vmatprep.subr.mxu0 0.0
      %715 = vmatpush2.msra.mxu0 0.0
      %716 = vmatprep.subr.mxu0 0.0
      %717 = vmatpush2.msra.mxu0 0.0
      %718 = vmatprep.subr.mxu0 0.0
      %719 = vmatpush2.msra.mxu0 0.0
      %720 = vmatprep.subr.mxu0 0.0
      %721 = vmatpush2.msra.mxu0 0.0
      %722 = vmatprep.subr.mxu0 0.0
      %723 = vmatpush2.msra.mxu0 0.0
      %724 = vmatprep.subr.mxu0 0.0
      %725 = vmatpush2.msra.mxu0 0.0
      %726 = vmatprep.subr.mxu0 0.0
      %727 = vmatpush2.msra.mxu0 0.0
      %728 = vmatprep.subr.mxu0 0.0
      %729 = vmatpush2.msra.mxu0 0.0
      %730 = vmatprep.subr.mxu0 0.0
      %731 = vmatpush2.msra.mxu0 0.0
      %732 = vmatprep.subr.mxu0 0.0
      %733 = vmatpush2.msra.mxu0 0.0
      %734 = vmatprep.subr.mxu0 0.0
      %735 = vmatpush2.msra.mxu0 0.0
      %736 = vmatprep.subr.mxu0 0.0
      %737 = vmatpush2.msra.mxu0 0.0
      %738 = vmatprep.mubr.f32.mxu0 0.0
      %v739 = vand.u32 %v357, 4294901760
      %740 = vmatmul.mubr.f32.gmra.mxu0 %v739
      %v741 = vpop.f32.mrf.mxu0
      %v742 = vadd.f32 %v665, %v741
      %v743 = vpop.f32.mrf.mxu0
      %744 = vdwg.mxu0
      %745 = vmatprep.subr.mxu0 0.0
      %746 = vmatpush1.msra.mxu0 0.0
      %747 = vmatprep.subr.mxu0 0.0
      %748 = vmatpush1.msra.mxu0 0.0
      %749 = vmatprep.subr.mxu0 0.0
      %750 = vmatpush1.msra.mxu0 0.0
      %751 = vmatprep.subr.mxu0 0.0
      %752 = vmatpush1.msra.mxu0 0.0
      %753 = vmatprep.subr.mxu0 0.0
      %754 = vmatpush1.msra.mxu0 0.0
      %755 = vmatprep.subr.mxu0 0.0
      %756 = vmatpush1.msra.mxu0 0.0
      %757 = vmatprep.subr.mxu0 0.0
      %758 = vmatpush1.msra.mxu0 0.0
      %759 = vmatprep.subr.mxu0 0.0
      %760 = vmatpush1.msra.mxu0 0.0
      %761 = vmatprep.subr.mxu0 0.0
      %762 = vmatpush1.msra.mxu0 0.0
      %763 = vmatprep.subr.mxu0 0.0
      %764 = vmatpush1.msra.mxu0 0.0
      %765 = vmatprep.subr.mxu0 0.0
      %766 = vmatpush1.msra.mxu0 0.0
      %767 = vmatprep.subr.mxu0 0.0
      %768 = vmatpush1.msra.mxu0 0.0
      %769 = vmatprep.subr.mxu0 0.0
      %770 = vmatpush1.msra.mxu0 0.0
      %771 = vmatprep.subr.mxu0 0.0
      %772 = vmatpush1.msra.mxu0 0.0
      %773 = vmatprep.subr.mxu0 0.0
      %v774 = vand.u32 %v330, 4294901760
      %775 = vmatpush1.msra.mxu0 %v774
      %776 = vmatprep.subr.mxu0 0.0
      %v777 = vand.u32 %v329, 4294901760
      %778 = vmatpush1.msra.mxu0 %v777
      %779 = vmatprep.subr.mxu0 0.0
      %780 = vmatpush2.msra.mxu0 0.0
      %781 = vmatprep.subr.mxu0 0.0
      %782 = vmatpush2.msra.mxu0 0.0
      %783 = vmatprep.subr.mxu0 0.0
      %784 = vmatpush2.msra.mxu0 0.0
      %785 = vmatprep.subr.mxu0 0.0
      %786 = vmatpush2.msra.mxu0 0.0
      %787 = vmatprep.subr.mxu0 0.0
      %788 = vmatpush2.msra.mxu0 0.0
      %789 = vmatprep.subr.mxu0 0.0
      %790 = vmatpush2.msra.mxu0 0.0
      %791 = vmatprep.subr.mxu0 0.0
      %792 = vmatpush2.msra.mxu0 0.0
      %793 = vmatprep.subr.mxu0 0.0
      %794 = vmatpush2.msra.mxu0 0.0
      %795 = vmatprep.subr.mxu0 0.0
      %796 = vmatpush2.msra.mxu0 0.0
      %797 = vmatprep.subr.mxu0 0.0
      %798 = vmatpush2.msra.mxu0 0.0
      %799 = vmatprep.subr.mxu0 0.0
      %800 = vmatpush2.msra.mxu0 0.0
      %801 = vmatprep.subr.mxu0 0.0
      %802 = vmatpush2.msra.mxu0 0.0
      %803 = vmatprep.subr.mxu0 0.0
      %804 = vmatpush2.msra.mxu0 0.0
      %805 = vmatprep.subr.mxu0 0.0
      %806 = vmatpush2.msra.mxu0 0.0
      %807 = vmatprep.subr.mxu0 0.0
      %808 = vmatpush2.msra.mxu0 0.0
      %809 = vmatprep.subr.mxu0 0.0
      %810 = vmatpush2.msra.mxu0 0.0
      %811 = vmatprep.mubr.f32.mxu0 0.0
      %v812 = vand.u32 %v357, 4294901760
      %813 = vmatmul.mubr.f32.gmra.mxu0 %v812
      %v814 = vpop.f32.mrf.mxu0
      %v815 = vadd.f32 %v742, %v814
      %v816 = vpop.f32.mrf.mxu0
      %817 = vdwg.mxu0
      %v818 = vld [vmem:[%s294] sm:$0xff]
      %v819 = vld [vmem:[%s301] sm:$0xff]
      %821 = vset.pattern.permute.xlu0 0
      %822 = vperm.xlu0 %821, %v818
      %v823 = vpop.permute.xlu0 %822
      %v825 = vlaneseq
      %v826 = vshrl.u32 %v825, 7
      %v827 = vsub.s32 0, %v826
      %v828 = vrot.slane %v819, %v827
      %v829 = vsub.f32 %v823, %v828
      %v830 = vand.u32 2147483647, %v829
      %831 = vset.pattern.permute.xlu0 1
      %832 = vperm.xlu0 %831, %v818
      %v833 = vpop.permute.xlu0 %832
      %v835 = vlaneseq
      %v836 = vshrl.u32 %v835, 7
      %v837 = vsub.s32 1, %v836
      %v838 = vrot.slane %v819, %v837
      %v839 = vsub.f32 %v833, %v838
      %v840 = vand.u32 2147483647, %v839
      %v841 = vadd.f32 %v830, %v840
      %842 = vset.pattern.permute.xlu0 2
      %843 = vperm.xlu0 %842, %v818
      %v844 = vpop.permute.xlu0 %843
      %v846 = vlaneseq
      %v847 = vshrl.u32 %v846, 7
      %v848 = vsub.s32 2, %v847
      %v849 = vrot.slane %v819, %v848
      %v850 = vsub.f32 %v844, %v849
      %v851 = vand.u32 2147483647, %v850
      %v852 = vadd.f32 %v841, %v851
      %853 = vset.pattern.permute.xlu0 3
      %854 = vperm.xlu0 %853, %v818
      %v855 = vpop.permute.xlu0 %854
      %v857 = vlaneseq
      %v858 = vshrl.u32 %v857, 7
      %v859 = vsub.s32 3, %v858
      %v860 = vrot.slane %v819, %v859
      %v861 = vsub.f32 %v855, %v860
      %v862 = vand.u32 2147483647, %v861
      %v863 = vadd.f32 %v852, %v862
      %v864 = vmul.f32 %v863, 5.0
      %v865 = vmul.f32 %v815, 2.0
      %v866 = vadd.f32 %v864, %v865
      %v867 = vld [vmem:[%s308] sm:$0xff]
      %v868 = vmul.f32 %v867, 2.0
      %v869 = vsub.f32 %v866, %v868
      %870 = vst [vmem:[%s315] sm:$0xff] %v869
      %p871 = scmp.lt.s32.totalorder %s20, 1
      %s872 = scalar_select %p871, %s20, 1
      %p873 = scmp.lt.s32.totalorder %s21, 0
      %s874 = scalar_select %p873, %s21, 0
      %s875 = sadd.s32 %s874, %s872
      %s876 = smul.addr %s875, 8
      %s877 = scalar_lea.vmem %s5, %s876
      // Predicated region
      $region41: #{cost_fn.1} parent=39 // pred_check
        %p878 = pneg %p180
      $region42: #{cost_fn.1} parent=39 // pred_check_branch
        %880 = sbr.rel (%p878) target = $region44
      $region43: #{cost_fn.1} parent=39 // pred_region
        _
      $region44: #{cost_fn.1} parent=39 // pred_fallthru
        _
    $region40: #{cost_fn.1} parent=5 // pred_fallthru
      _
    %p881 = scmp.le.s32.totalorder 2, %s11
    // Predicated region
    $region45: #{cost_fn.1} parent=5 // pred_check
      %p882 = pneg %p881
    $region46: #{cost_fn.1} parent=5 // pred_check_branch
      %884 = sbr.rel (%p882) target = $region48
    $region47: #{cost_fn.1} parent=5 // pred_region
      %s885 = ssub.s32 %s11, 2
      // Predicated region
      $region49: #{cost_fn.1} parent=47 // pred_check
        %p886 = pneg %p186
      $region50: #{cost_fn.1} parent=47 // pred_check_branch
        %888 = sbr.rel (%p886) target = $region52
      $region51: #{cost_fn.1} parent=47 // pred_region
        %p889 = scmp.lt.s32.totalorder %s22, 1
        %s890 = scalar_select %p889, %s22, 1
        %p891 = scmp.lt.s32.totalorder %s23, 0
        %s892 = scalar_select %p891, %s23, 0
        %s893 = sadd.s32 %s892, %s890
        %s894 = smul.addr %s893, 8
        %s895 = scalar_lea.vmem %s5, %s894
      $region52: #{cost_fn.1} parent=47 // pred_fallthru
        _
    $region48: #{cost_fn.1} parent=5 // pred_fallthru
      _
  $region6: #{cost_fn.1} parent=0 // loop_footer
    %s15 = sadd.s32 1, %s11
  $region7: #{cost_fn.1} parent=0 // loop_footer_branch
    %10 = sbr.rel target = $region3
  $region8: #{cost_fn.1} parent=0 // loop_exit
    _

</llo_original>
